<compile_context>
chip_gen: v5e
topology: v5e:2x2
jax: 0.10.0
libtpu: 0.0.40
codegen_flags: <defaults>
</compile_context>

<pallas_src>
import jax
import jax.numpy as jnp
import numpy as np
from jax.experimental import pallas as pl
from jax.experimental.pallas import tpu as pltpu

LANE = 128


def _round_up(x, m):
    return ((x + m - 1) // m) * m


# ----------------------------- fused Pallas kernel -------------------------- #
def fused_forward_kernel(xbd_ref, wfc_ref, ap_ref, wg_ref, bg_ref, out_ref):
    # 1) per-type projection: one block-diagonal matmul. The per-type bias is
    #    folded into a constant-1 column of each type's slot in xbd / wfc.
    h = jnp.dot(xbd_ref[...], wfc_ref[...], preferred_element_type=jnp.float32)

    # 2) GIN layers, H stays resident in VMEM between layers.
    #    rst = A' @ h   (A' = A_mean + (1+eps) I : mean aggregation + self term)
    #    h   = sigmoid(rst @ W_l + b_l)
    num_layers = wg_ref.shape[0]
    for l in range(num_layers):                       # static, unrolled
        rst = jnp.dot(ap_ref[...], h, preferred_element_type=jnp.float32)
        y = jnp.dot(rst, wg_ref[l], preferred_element_type=jnp.float32) + bg_ref[l]
        h = jax.nn.sigmoid(y)

    # 3) lane-dense (NP, HP) store; the wrapper slices [:N, :C].
    out_ref[...] = h


# ----------------------------- packing / wrapper ----------------------------- #
def _pack_inputs(features_list, fc_params, gin_params, a_mean):
    T = len(features_list)
    counts = [int(x.shape[0]) for x in features_list]
    in_dims = [int(x.shape[1]) for x in features_list]
    N = sum(counts)
    H = int(gin_params[0][0].shape[0])
    C = int(gin_params[-1][0].shape[1])

    NP = _round_up(N, LANE)                    # node axis (rows + contraction cols)
    DP = _round_up(max(in_dims) + 1, LANE)     # per-type input slot (+1 bias column)
    HP = _round_up(max(H, C), LANE)            # hidden / class lane width

    # block-diagonal input + projection weight; bias folded into column DP-1.
    xbd = jnp.zeros((NP, T * DP), jnp.float32)
    wfc = jnp.zeros((T * DP, HP), jnp.float32)
    row = 0
    for t, (x, (w, b)) in enumerate(zip(features_list, fc_params)):
        n_t, d_t = x.shape
        col = t * DP
        xbd = xbd.at[row:row + n_t, col:col + d_t].set(x)
        xbd = xbd.at[row:row + n_t, col + DP - 1].set(1.0)     # bias "ones" column
        wfc = wfc.at[col:col + d_t, :H].set(w)
        wfc = wfc.at[col + DP - 1, :H].set(b)
        row += n_t

    # A' = A_mean + (1 + eps) I, eps = 0 (myGINConv init_eps=0, learn_eps=False).
    # Padded rows/cols are zero, so padded nodes never pollute real ones.
    ap = jnp.zeros((NP, NP), jnp.float32)
    ap = ap.at[:N, :N].set(a_mean + jnp.eye(N, dtype=jnp.float32))

    # Stacked GIN Linear weights/biases, zero-padded to (HP, HP) so the padded
    # hidden lanes never leak into real output columns.
    L = len(gin_params)
    wg = jnp.zeros((L, HP, HP), jnp.float32)
    bg = jnp.zeros((L, 1, HP), jnp.float32)
    for l, (w, b) in enumerate(gin_params):
        wg = wg.at[l, : w.shape[0], : w.shape[1]].set(w)
        bg = bg.at[l, 0, : b.shape[0]].set(b)

    return xbd, wfc, ap, wg, bg, N, C


def mygat_forward(features_list, fc_params, gin_params, a_mean):
    xbd, wfc, ap, wg, bg, N, C = _pack_inputs(
        features_list, fc_params, gin_params, a_mean
    )
    NP, TD = xbd.shape
    HP = wfc.shape[1]
    L = wg.shape[0]

    out = pl.pallas_call(
        fused_forward_kernel,
        out_shape=jax.ShapeDtypeStruct((NP, HP), jnp.float32),
        grid_spec=pl.GridSpec(
            grid=(1,),  # whole (padded) problem fits one VMEM-resident block
            in_specs=[
                pl.BlockSpec((NP, TD), lambda i: (0, 0)),        # block-diag X
                pl.BlockSpec((TD, HP), lambda i: (0, 0)),        # block-diag W_fc
                pl.BlockSpec((NP, NP), lambda i: (0, 0)),        # A' = A_mean + I
                pl.BlockSpec((L, HP, HP), lambda i: (0, 0, 0)),  # stacked GIN W
                pl.BlockSpec((L, 1, HP), lambda i: (0, 0, 0)),   # stacked GIN b
            ],
            out_specs=pl.BlockSpec((NP, HP), lambda i: (0, 0)),
        ),
        compiler_params=pltpu.CompilerParams(
            dimension_semantics=("arbitrary",),
            vmem_limit_bytes=32 * 1024 * 1024,
        ),
    )(xbd, wfc, ap, wg, bg)

    logits = out[:N, :C]
    # TODO(synk): HGNN_AC attribute completion not available; loss_ac = 0 (IMDB/ACM).
    loss_ac = jnp.zeros((), jnp.float32)
    return logits, loss_ac


# ----------------------------- pure-JAX reference ---------------------------- #
def reference_forward(features_list, fc_params, gin_params, a_mean):
    hs = [x @ w + b for x, (w, b) in zip(features_list, fc_params)]
    h = jnp.concatenate(hs, axis=0)
    for (w, b) in gin_params[:-1]:
        h = jax.nn.sigmoid((h + a_mean @ h) @ w + b)
    w, b = gin_params[-1]
    return jax.nn.sigmoid((h + a_mean @ h) @ w + b)


# --------------------------------- main -------------------------------------- #
def xavier_normal(key, fan_in, fan_out, gain=1.0):
    std = gain * np.sqrt(2.0 / (fan_in + fan_out))
    return jax.random.normal(key, (fan_in, fan_out), jnp.float32) * std


if __name__ == "__main__":
    key = jax.random.PRNGKey(0)

    in_dims = [16, 24, 32]          # per-node-type input feature dims
    nodes_per_type = 8
    num_hidden = 32
    num_classes = 4
    num_layers = 2
    N = nodes_per_type * len(in_dims)   # 24 nodes total

    keys = jax.random.split(key, 32)
    ki = iter(keys)

    # node features per type
    features_list = [
        jax.random.normal(next(ki), (nodes_per_type, d), jnp.float32) for d in in_dims
    ]

    # fc_list: Linear(in_dim, num_hidden), xavier_normal(gain=1.414) weights
    fc_params = []
    for d in in_dims:
        w = xavier_normal(next(ki), d, num_hidden, gain=1.414)
        b = jax.random.normal(next(ki), (num_hidden,), jnp.float32) * 0.01
        fc_params.append((w, b))

    # GIN layers: num_layers x Linear(H,H) + final Linear(H, num_classes)
    gin_params = []
    for _ in range(num_layers):
        w = xavier_normal(next(ki), num_hidden, num_hidden)
        b = jax.random.normal(next(ki), (num_hidden,), jnp.float32) * 0.01
        gin_params.append((w, b))
    w = xavier_normal(next(ki), num_hidden, num_classes)
    b = jax.random.normal(next(ki), (num_classes,), jnp.float32) * 0.01
    gin_params.append((w, b))

    # deterministic random graph; A_mean[i, j] = 1/in_deg(i) if edge j->i
    adj = jax.random.bernoulli(next(ki), 0.3, (N, N)).astype(jnp.float32)
    in_deg = adj.sum(axis=1, keepdims=True)
    a_mean = jnp.where(in_deg > 0, adj / jnp.maximum(in_deg, 1.0), 0.0)

    logits, loss_ac = jax.jit(mygat_forward)(
        features_list, fc_params, gin_params, a_mean
    )
    jax.block_until_ready(logits)

    ref = reference_forward(features_list, fc_params, gin_params, a_mean)
    np.testing.assert_allclose(
        np.asarray(logits), np.asarray(ref), rtol=1e-4, atol=1e-5
    )
    assert logits.shape == (N, num_classes)

    print("KERNEL_OK")
</pallas_src>

<mosaic_0001>
module attributes {stable_mosaic.version = 11 : i64} {
  func.func @fused_forward_kernel(%arg0: i32, %arg1: memref<128x384xf32, #tpu.memory_space<vmem>>, %arg2: memref<384x128xf32, #tpu.memory_space<vmem>>, %arg3: memref<128x128xf32, #tpu.memory_space<vmem>>, %arg4: memref<3x128x128xf32, #tpu.memory_space<vmem>>, %arg5: memref<3x1x128xf32, #tpu.memory_space<vmem>>, %arg6: memref<128x128xf32, #tpu.memory_space<vmem>>) attributes {dimension_semantics = [#tpu.dimension_semantics<arbitrary>], iteration_bounds = array<i64: 1>, scalar_prefetch = 0 : i64, scratch_operands = 0 : i64, tpu.core_type = #tpu.core_type<tc>, window_params = [{pipeline_mode = #tpu.pipeline_mode<synchronous>, transform_indices = @transform_0, window_bounds = array<i64: 128, 384>}, {pipeline_mode = #tpu.pipeline_mode<synchronous>, transform_indices = @transform_1, window_bounds = array<i64: 384, 128>}, {pipeline_mode = #tpu.pipeline_mode<synchronous>, transform_indices = @transform_2, window_bounds = array<i64: 128, 128>}, {pipeline_mode = #tpu.pipeline_mode<synchronous>, transform_indices = @transform_3, window_bounds = array<i64: 3, 128, 128>}, {pipeline_mode = #tpu.pipeline_mode<synchronous>, transform_indices = @transform_4, window_bounds = array<i64: 3, 1, 128>}, {pipeline_mode = #tpu.pipeline_mode<synchronous>, transform_indices = @transform_5, window_bounds = array<i64: 128, 128>}]} {
    %c0 = arith.constant 0 : index
    %c0_0 = arith.constant 0 : index
    %0 = vector.load %arg1[%c0, %c0_0] : memref<128x384xf32, #tpu.memory_space<vmem>>, vector<128x384xf32>
    %c0_1 = arith.constant 0 : index
    %c0_2 = arith.constant 0 : index
    %1 = vector.load %arg2[%c0_1, %c0_2] : memref<384x128xf32, #tpu.memory_space<vmem>>, vector<384x128xf32>
    %cst = arith.constant dense<0.000000e+00> : vector<128x128xf32>
    %2 = tpu.matmul %0, %1, %cst {dimension_numbers = #tpu.dot_dimension_numbers<[1], [0], [0], [1], [0, 0, 1, 1], [], []>} : vector<128x384xf32>, vector<384x128xf32>, vector<128x128xf32> -> vector<128x128xf32>
    %c0_3 = arith.constant 0 : index
    %c0_4 = arith.constant 0 : index
    %3 = vector.load %arg3[%c0_3, %c0_4] : memref<128x128xf32, #tpu.memory_space<vmem>>, vector<128x128xf32>
    %cst_5 = arith.constant dense<0.000000e+00> : vector<128x128xf32>
    %4 = tpu.matmul %3, %2, %cst_5 {dimension_numbers = #tpu.dot_dimension_numbers<[1], [0], [0], [1], [0, 0, 1, 1], [], []>} : vector<128x128xf32>, vector<128x128xf32>, vector<128x128xf32> -> vector<128x128xf32>
    %c0_6 = arith.constant 0 : index
    %c0_7 = arith.constant 0 : index
    %c0_8 = arith.constant 0 : index
    %5 = vector.load %arg4[%c0_6, %c0_7, %c0_8] : memref<3x128x128xf32, #tpu.memory_space<vmem>>, vector<1x128x128xf32>
    %6 = vector.shape_cast %5 : vector<1x128x128xf32> to vector<128x128xf32>
    %cst_9 = arith.constant dense<0.000000e+00> : vector<128x128xf32>
    %7 = tpu.matmul %4, %6, %cst_9 {dimension_numbers = #tpu.dot_dimension_numbers<[1], [0], [0], [1], [0, 0, 1, 1], [], []>} : vector<128x128xf32>, vector<128x128xf32>, vector<128x128xf32> -> vector<128x128xf32>
    %c0_10 = arith.constant 0 : index
    %c0_11 = arith.constant 0 : index
    %c0_12 = arith.constant 0 : index
    %8 = vector.load %arg5[%c0_10, %c0_11, %c0_12] : memref<3x1x128xf32, #tpu.memory_space<vmem>>, vector<1x1x128xf32>
    %9 = vector.shape_cast %8 : vector<1x1x128xf32> to vector<1x128xf32>
    %10 = vector.broadcast %9 : vector<1x128xf32> to vector<128x128xf32>
    %11 = arith.addf %7, %10 : vector<128x128xf32>
    %12 = arith.negf %11 : vector<128x128xf32>
    %13 = math.exp %12 : vector<128x128xf32>
    %cst_13 = arith.constant 1.000000e+00 : f32
    %14 = vector.broadcast %cst_13 : f32 to vector<128x128xf32>
    %15 = arith.addf %14, %13 : vector<128x128xf32>
    %16 = arith.divf %14, %15 : vector<128x128xf32>
    %c0_14 = arith.constant 0 : index
    %c0_15 = arith.constant 0 : index
    %17 = vector.load %arg3[%c0_14, %c0_15] : memref<128x128xf32, #tpu.memory_space<vmem>>, vector<128x128xf32>
    %cst_16 = arith.constant dense<0.000000e+00> : vector<128x128xf32>
    %18 = tpu.matmul %17, %16, %cst_16 {dimension_numbers = #tpu.dot_dimension_numbers<[1], [0], [0], [1], [0, 0, 1, 1], [], []>} : vector<128x128xf32>, vector<128x128xf32>, vector<128x128xf32> -> vector<128x128xf32>
    %c1 = arith.constant 1 : index
    %c0_17 = arith.constant 0 : index
    %c0_18 = arith.constant 0 : index
    %19 = vector.load %arg4[%c1, %c0_17, %c0_18] : memref<3x128x128xf32, #tpu.memory_space<vmem>>, vector<1x128x128xf32>
    %20 = vector.shape_cast %19 : vector<1x128x128xf32> to vector<128x128xf32>
    %cst_19 = arith.constant dense<0.000000e+00> : vector<128x128xf32>
    %21 = tpu.matmul %18, %20, %cst_19 {dimension_numbers = #tpu.dot_dimension_numbers<[1], [0], [0], [1], [0, 0, 1, 1], [], []>} : vector<128x128xf32>, vector<128x128xf32>, vector<128x128xf32> -> vector<128x128xf32>
    %c1_20 = arith.constant 1 : index
    %c0_21 = arith.constant 0 : index
    %c0_22 = arith.constant 0 : index
    %22 = vector.load %arg5[%c1_20, %c0_21, %c0_22] : memref<3x1x128xf32, #tpu.memory_space<vmem>>, vector<1x1x128xf32>
    %23 = vector.shape_cast %22 : vector<1x1x128xf32> to vector<1x128xf32>
    %24 = vector.broadcast %23 : vector<1x128xf32> to vector<128x128xf32>
    %25 = arith.addf %21, %24 : vector<128x128xf32>
    %26 = arith.negf %25 : vector<128x128xf32>
    %27 = math.exp %26 : vector<128x128xf32>
    %cst_23 = arith.constant 1.000000e+00 : f32
    %28 = vector.broadcast %cst_23 : f32 to vector<128x128xf32>
    %29 = arith.addf %28, %27 : vector<128x128xf32>
    %30 = arith.divf %28, %29 : vector<128x128xf32>
    %c0_24 = arith.constant 0 : index
    %c0_25 = arith.constant 0 : index
    %31 = vector.load %arg3[%c0_24, %c0_25] : memref<128x128xf32, #tpu.memory_space<vmem>>, vector<128x128xf32>
    %cst_26 = arith.constant dense<0.000000e+00> : vector<128x128xf32>
    %32 = tpu.matmul %31, %30, %cst_26 {dimension_numbers = #tpu.dot_dimension_numbers<[1], [0], [0], [1], [0, 0, 1, 1], [], []>} : vector<128x128xf32>, vector<128x128xf32>, vector<128x128xf32> -> vector<128x128xf32>
    %c2 = arith.constant 2 : index
    %c0_27 = arith.constant 0 : index
    %c0_28 = arith.constant 0 : index
    %33 = vector.load %arg4[%c2, %c0_27, %c0_28] : memref<3x128x128xf32, #tpu.memory_space<vmem>>, vector<1x128x128xf32>
    %34 = vector.shape_cast %33 : vector<1x128x128xf32> to vector<128x128xf32>
    %cst_29 = arith.constant dense<0.000000e+00> : vector<128x128xf32>
    %35 = tpu.matmul %32, %34, %cst_29 {dimension_numbers = #tpu.dot_dimension_numbers<[1], [0], [0], [1], [0, 0, 1, 1], [], []>} : vector<128x128xf32>, vector<128x128xf32>, vector<128x128xf32> -> vector<128x128xf32>
    %c2_30 = arith.constant 2 : index
    %c0_31 = arith.constant 0 : index
    %c0_32 = arith.constant 0 : index
    %36 = vector.load %arg5[%c2_30, %c0_31, %c0_32] : memref<3x1x128xf32, #tpu.memory_space<vmem>>, vector<1x1x128xf32>
    %37 = vector.shape_cast %36 : vector<1x1x128xf32> to vector<1x128xf32>
    %38 = vector.broadcast %37 : vector<1x128xf32> to vector<128x128xf32>
    %39 = arith.addf %35, %38 : vector<128x128xf32>
    %40 = arith.negf %39 : vector<128x128xf32>
    %41 = math.exp %40 : vector<128x128xf32>
    %cst_33 = arith.constant 1.000000e+00 : f32
    %42 = vector.broadcast %cst_33 : f32 to vector<128x128xf32>
    %43 = arith.addf %42, %41 : vector<128x128xf32>
    %44 = arith.divf %42, %43 : vector<128x128xf32>
    %c0_34 = arith.constant 0 : index
    %c0_35 = arith.constant 0 : index
    %45 = vector.load %arg6[%c0_34, %c0_35] : memref<128x128xf32, #tpu.memory_space<vmem>>, vector<128x128xf32>
    tpu.vector_store %arg6[%c0_34, %c0_35], %44 {strides = array<i32>} : memref<128x128xf32, #tpu.memory_space<vmem>>, vector<128x128xf32>,
    return
  }
  func.func @transform_0(%arg0: i32) -> (i32, i32) {
    %c0_i32 = arith.constant 0 : i32
    %c0_i32_0 = arith.constant 0 : i32
    %c0_i32_1 = arith.constant 0 : i32
    return %c0_i32, %c0_i32_0 : i32, i32
  }
  func.func @transform_1(%arg0: i32) -> (i32, i32) {
    %c0_i32 = arith.constant 0 : i32
    %c0_i32_0 = arith.constant 0 : i32
    %c0_i32_1 = arith.constant 0 : i32
    return %c0_i32, %c0_i32_0 : i32, i32
  }
  func.func @transform_2(%arg0: i32) -> (i32, i32) {
    %c0_i32 = arith.constant 0 : i32
    %c0_i32_0 = arith.constant 0 : i32
    %c0_i32_1 = arith.constant 0 : i32
    return %c0_i32, %c0_i32_0 : i32, i32
  }
  func.func @transform_3(%arg0: i32) -> (i32, i32, i32) {
    %c0_i32 = arith.constant 0 : i32
    %c0_i32_0 = arith.constant 0 : i32
    %c0_i32_1 = arith.constant 0 : i32
    %c0_i32_2 = arith.constant 0 : i32
    return %c0_i32, %c0_i32_0, %c0_i32_1 : i32, i32, i32
  }
  func.func @transform_4(%arg0: i32) -> (i32, i32, i32) {
    %c0_i32 = arith.constant 0 : i32
    %c0_i32_0 = arith.constant 0 : i32
    %c0_i32_1 = arith.constant 0 : i32
    %c0_i32_2 = arith.constant 0 : i32
    return %c0_i32, %c0_i32_0, %c0_i32_1 : i32, i32, i32
  }
  func.func @transform_5(%arg0: i32) -> (i32, i32) {
    %c0_i32 = arith.constant 0 : i32
    %c0_i32_0 = arith.constant 0 : i32
    %c0_i32_1 = arith.constant 0 : i32
    return %c0_i32, %c0_i32_0 : i32, i32
  }
}

</mosaic_0001>

<llo_original>
// kernel: mygat_forward.1
$region0: #{mygat_forward.1}
  #allocation0 [shape = 'u32[]', space=smem, size = 0x4, offset = 0x4, fixed_abs, tag = 'smem constant byte address 0x4 - core index']
  #allocation1 [shape = 'u32[72,128]{1,0:T(1,128)}', space=vmem, size = 0x9000, scoped, tag = 'internal scratch']
  %s0 = inlined_call_operand.vmem [shape: f32[128,384], index: 0, kind: input, shape index: {}]
  %s1 = inlined_call_operand.vmem [shape: f32[384,128], index: 1, kind: input, shape index: {}]
  %s2 = inlined_call_operand.vmem [shape: f32[128,128], index: 2, kind: input, shape index: {}]
  %s3 = inlined_call_operand.vmem [shape: f32[3,128,128], index: 3, kind: input, shape index: {}]
  %s4 = inlined_call_operand.vmem [shape: f32[3,1,128], index: 4, kind: input, shape index: {}]
  %s5 = inlined_call_operand.vmem [shape: f32[128,128], index: 5, kind: output, shape index: {}]
  %s6 = sld [smem:[#allocation0]]
  $region30: #{mygat_forward.1} parent=0
    _
  %s8 = ssub.s32 1, %s6
  %s9 = scalar_select 0, %s8, %s6
  // Predicated region
  $region2: #{mygat_forward.1} parent=0 // pred_check
    _
  $region3: #{mygat_forward.1} parent=0 // pred_check_branch
    %11 = sbr.rel (0) target = $region5
  $region4: #{mygat_forward.1} parent=0 // pred_region
    _
  $region5: #{mygat_forward.1} parent=0 // pred_fallthru
    _
  // Predicated region
  $region6: #{mygat_forward.1} parent=0 // pred_check
    _
  $region7: #{mygat_forward.1} parent=0 // pred_check_branch
    %13 = sbr.rel (0) target = $region9
  $region8: #{mygat_forward.1} parent=0 // pred_region
    _
  $region9: #{mygat_forward.1} parent=0 // pred_fallthru
    _
  // Predicated region
  $region10: #{mygat_forward.1} parent=0 // pred_check
    _
  $region11: #{mygat_forward.1} parent=0 // pred_check_branch
    %15 = sbr.rel (0) target = $region13
  $region12: #{mygat_forward.1} parent=0 // pred_region
    _
  $region13: #{mygat_forward.1} parent=0 // pred_fallthru
    _
  // Predicated region
  $region14: #{mygat_forward.1} parent=0 // pred_check
    _
  $region15: #{mygat_forward.1} parent=0 // pred_check_branch
    %17 = sbr.rel (0) target = $region17
  $region16: #{mygat_forward.1} parent=0 // pred_region
    _
  $region17: #{mygat_forward.1} parent=0 // pred_fallthru
    _
  // Predicated region
  $region18: #{mygat_forward.1} parent=0 // pred_check
    _
  $region19: #{mygat_forward.1} parent=0 // pred_check_branch
    %19 = sbr.rel (0) target = $region21
  $region20: #{mygat_forward.1} parent=0 // pred_region
    _
  $region21: #{mygat_forward.1} parent=0 // pred_fallthru
    _
  %v20 = vld [vmem:[%s0] sm:$0xff]
  %v21 = vld [vmem:[%s0 + $0x8] sm:$0xff]
  %v22 = vld [vmem:[%s0 + $0x10] sm:$0xff]
  %v23 = vld [vmem:[%s0 + $0x18] sm:$0xff]
  %v24 = vld [vmem:[%s0 + $0x20] sm:$0xff]
  %v25 = vld [vmem:[%s0 + $0x28] sm:$0xff]
  %v26 = vld [vmem:[%s0 + $0x30] sm:$0xff]
  %v27 = vld [vmem:[%s0 + $0x38] sm:$0xff]
  %v28 = vld [vmem:[%s0 + $0x40] sm:$0xff]
  %v29 = vld [vmem:[%s0 + $0x48] sm:$0xff]
  %v30 = vld [vmem:[%s0 + $0x50] sm:$0xff]
  %v31 = vld [vmem:[%s0 + $0x58] sm:$0xff]
  %v32 = vld [vmem:[%s0 + $0x60] sm:$0xff]
  %v33 = vld [vmem:[%s0 + $0x68] sm:$0xff]
  %v34 = vld [vmem:[%s0 + $0x70] sm:$0xff]
  %v35 = vld [vmem:[%s0 + $0x78] sm:$0xff]
  %v36 = vld [vmem:[%s0 + $0x80] sm:$0xff]
  %v37 = vld [vmem:[%s0 + $0x88] sm:$0xff]
  %v38 = vld [vmem:[%s0 + $0x90] sm:$0xff]
  %v39 = vld [vmem:[%s0 + $0x98] sm:$0xff]
  %v40 = vld [vmem:[%s0 + $0xa0] sm:$0xff]
  %v41 = vld [vmem:[%s0 + $0xa8] sm:$0xff]
  %v42 = vld [vmem:[%s0 + $0xb0] sm:$0xff]
  %v43 = vld [vmem:[%s0 + $0xb8] sm:$0xff]
  %v44 = vld [vmem:[%s0 + $0xc0] sm:$0xff]
  %v45 = vld [vmem:[%s0 + $0xc8] sm:$0xff]
  %v46 = vld [vmem:[%s0 + $0xd0] sm:$0xff]
  %v47 = vld [vmem:[%s0 + $0xd8] sm:$0xff]
  %v48 = vld [vmem:[%s0 + $0xe0] sm:$0xff]
  %v49 = vld [vmem:[%s0 + $0xe8] sm:$0xff]
  %v50 = vld [vmem:[%s0 + $0xf0] sm:$0xff]
  %v51 = vld [vmem:[%s0 + $0xf8] sm:$0xff]
  %v52 = vld [vmem:[%s0 + $0x100] sm:$0xff]
  %v53 = vld [vmem:[%s0 + $0x108] sm:$0xff]
  %v54 = vld [vmem:[%s0 + $0x110] sm:$0xff]
  %v55 = vld [vmem:[%s0 + $0x118] sm:$0xff]
  %v56 = vld [vmem:[%s0 + $0x120] sm:$0xff]
  %v57 = vld [vmem:[%s0 + $0x128] sm:$0xff]
  %v58 = vld [vmem:[%s0 + $0x130] sm:$0xff]
  %v59 = vld [vmem:[%s0 + $0x138] sm:$0xff]
  %v60 = vld [vmem:[%s0 + $0x140] sm:$0xff]
  %v61 = vld [vmem:[%s0 + $0x148] sm:$0xff]
  %v62 = vld [vmem:[%s0 + $0x150] sm:$0xff]
  %v63 = vld [vmem:[%s0 + $0x158] sm:$0xff]
  %v64 = vld [vmem:[%s0 + $0x160] sm:$0xff]
  %v65 = vld [vmem:[%s0 + $0x168] sm:$0xff]
  %v66 = vld [vmem:[%s0 + $0x170] sm:$0xff]
  %v67 = vld [vmem:[%s0 + $0x178] sm:$0xff]
  %v68 = vld [vmem:[%s1] sm:$0xff]
  %v69 = vld [vmem:[%s1 + $0x8] sm:$0xff]
  %v70 = vld [vmem:[%s1 + $0x10] sm:$0xff]
  %v71 = vld [vmem:[%s1 + $0x18] sm:$0xff]
  %v72 = vld [vmem:[%s1 + $0x20] sm:$0xff]
  %v73 = vld [vmem:[%s1 + $0x28] sm:$0xff]
  %v74 = vld [vmem:[%s1 + $0x30] sm:$0xff]
  %v75 = vld [vmem:[%s1 + $0x38] sm:$0xff]
  %v76 = vld [vmem:[%s1 + $0x40] sm:$0xff]
  %v77 = vld [vmem:[%s1 + $0x48] sm:$0xff]
  %v78 = vld [vmem:[%s1 + $0x50] sm:$0xff]
  %v79 = vld [vmem:[%s1 + $0x58] sm:$0xff]
  %v80 = vld [vmem:[%s1 + $0x60] sm:$0xff]
  %v81 = vld [vmem:[%s1 + $0x68] sm:$0xff]
  %v82 = vld [vmem:[%s1 + $0x70] sm:$0xff]
  %v83 = vld [vmem:[%s1 + $0x78] sm:$0xff]
  %v84 = vld [vmem:[%s1 + $0x80] sm:$0xff]
  %v85 = vld [vmem:[%s1 + $0x88] sm:$0xff]
  %v86 = vld [vmem:[%s1 + $0x90] sm:$0xff]
  %v87 = vld [vmem:[%s1 + $0x98] sm:$0xff]
  %v88 = vld [vmem:[%s1 + $0xa0] sm:$0xff]
  %v89 = vld [vmem:[%s1 + $0xa8] sm:$0xff]
  %v90 = vld [vmem:[%s1 + $0xb0] sm:$0xff]
  %v91 = vld [vmem:[%s1 + $0xb8] sm:$0xff]
  %v92 = vld [vmem:[%s1 + $0xc0] sm:$0xff]
  %v93 = vld [vmem:[%s1 + $0xc8] sm:$0xff]
  %v94 = vld [vmem:[%s1 + $0xd0] sm:$0xff]
  %v95 = vld [vmem:[%s1 + $0xd8] sm:$0xff]
  %v96 = vld [vmem:[%s1 + $0xe0] sm:$0xff]
  %v97 = vld [vmem:[%s1 + $0xe8] sm:$0xff]
  %v98 = vld [vmem:[%s1 + $0xf0] sm:$0xff]
  %v99 = vld [vmem:[%s1 + $0xf8] sm:$0xff]
  %v100 = vld [vmem:[%s1 + $0x100] sm:$0xff]
  %v101 = vld [vmem:[%s1 + $0x108] sm:$0xff]
  %v102 = vld [vmem:[%s1 + $0x110] sm:$0xff]
  %v103 = vld [vmem:[%s1 + $0x118] sm:$0xff]
  %v104 = vld [vmem:[%s1 + $0x120] sm:$0xff]
  %v105 = vld [vmem:[%s1 + $0x128] sm:$0xff]
  %v106 = vld [vmem:[%s1 + $0x130] sm:$0xff]
  %v107 = vld [vmem:[%s1 + $0x138] sm:$0xff]
  %v108 = vld [vmem:[%s1 + $0x140] sm:$0xff]
  %v109 = vld [vmem:[%s1 + $0x148] sm:$0xff]
  %v110 = vld [vmem:[%s1 + $0x150] sm:$0xff]
  %v111 = vld [vmem:[%s1 + $0x158] sm:$0xff]
  %v112 = vld [vmem:[%s1 + $0x160] sm:$0xff]
  %v113 = vld [vmem:[%s1 + $0x168] sm:$0xff]
  %v114 = vld [vmem:[%s1 + $0x170] sm:$0xff]
  %v115 = vld [vmem:[%s1 + $0x178] sm:$0xff]
  %116 = vmatpush.msra.mxu0 %v83
  %117 = vmatpush.msra.mxu0 %v82
  %118 = vmatpush.msra.mxu0 %v81
  %119 = vmatpush.msra.mxu0 %v80
  %120 = vmatpush.msra.mxu0 %v79
  %121 = vmatpush.msra.mxu0 %v78
  %122 = vmatpush.msra.mxu0 %v77
  %123 = vmatpush.msra.mxu0 %v76
  %124 = vmatpush.msra.mxu0 %v75
  %125 = vmatpush.msra.mxu0 %v74
  %126 = vmatpush.msra.mxu0 %v73
  %127 = vmatpush.msra.mxu0 %v72
  %128 = vmatpush.msra.mxu0 %v71
  %129 = vmatpush.msra.mxu0 %v70
  %130 = vmatpush.msra.mxu0 %v69
  %131 = vmatpush.msra.mxu0 %v68
  %132 = vmatmul.f32.gmra.mxu0 %v20
  %v133 = vpop.f32.mrf.mxu0
  %v134 = vadd.f32 0.0, %v133
  %135 = vmatmul.f32.gmra.mxu0 %v23
  %v136 = vpop.f32.mrf.mxu0
  %v137 = vadd.f32 0.0, %v136
  %138 = vmatmul.f32.gmra.mxu0 %v26
  %v139 = vpop.f32.mrf.mxu0
  %v140 = vadd.f32 0.0, %v139
  %141 = vmatmul.f32.gmra.mxu0 %v29
  %v142 = vpop.f32.mrf.mxu0
  %v143 = vadd.f32 0.0, %v142
  %144 = vmatmul.f32.gmra.mxu0 %v32
  %v145 = vpop.f32.mrf.mxu0
  %v146 = vadd.f32 0.0, %v145
  %147 = vmatmul.f32.gmra.mxu0 %v35
  %v148 = vpop.f32.mrf.mxu0
  %v149 = vadd.f32 0.0, %v148
  %150 = vmatmul.f32.gmra.mxu0 %v38
  %v151 = vpop.f32.mrf.mxu0
  %v152 = vadd.f32 0.0, %v151
  %153 = vmatmul.f32.gmra.mxu0 %v41
  %v154 = vpop.f32.mrf.mxu0
  %v155 = vadd.f32 0.0, %v154
  %156 = vmatmul.f32.gmra.mxu0 %v44
  %v157 = vpop.f32.mrf.mxu0
  %v158 = vadd.f32 0.0, %v157
  %159 = vmatmul.f32.gmra.mxu0 %v47
  %v160 = vpop.f32.mrf.mxu0
  %v161 = vadd.f32 0.0, %v160
  %162 = vmatmul.f32.gmra.mxu0 %v50
  %v163 = vpop.f32.mrf.mxu0
  %v164 = vadd.f32 0.0, %v163
  %165 = vmatmul.f32.gmra.mxu0 %v53
  %v166 = vpop.f32.mrf.mxu0
  %v167 = vadd.f32 0.0, %v166
  %168 = vmatmul.f32.gmra.mxu0 %v56
  %v169 = vpop.f32.mrf.mxu0
  %v170 = vadd.f32 0.0, %v169
  %171 = vmatmul.f32.gmra.mxu0 %v59
  %v172 = vpop.f32.mrf.mxu0
  %v173 = vadd.f32 0.0, %v172
  %174 = vmatmul.f32.gmra.mxu0 %v62
  %v175 = vpop.f32.mrf.mxu0
  %v176 = vadd.f32 0.0, %v175
  %177 = vmatmul.f32.gmra.mxu0 %v65
  %v178 = vpop.f32.mrf.mxu0
  %v179 = vadd.f32 0.0, %v178
  %180 = vdwg.mxu0
  %181 = vmatpush.msra.mxu0 %v99
  %182 = vmatpush.msra.mxu0 %v98
  %183 = vmatpush.msra.mxu0 %v97
  %184 = vmatpush.msra.mxu0 %v96
  %185 = vmatpush.msra.mxu0 %v95
  %186 = vmatpush.msra.mxu0 %v94
  %187 = vmatpush.msra.mxu0 %v93
  %188 = vmatpush.msra.mxu0 %v92
  %189 = vmatpush.msra.mxu0 %v91
  %190 = vmatpush.msra.mxu0 %v90
  %191 = vmatpush.msra.mxu0 %v89
  %192 = vmatpush.msra.mxu0 %v88
  %193 = vmatpush.msra.mxu0 %v87
  %194 = vmatpush.msra.mxu0 %v86
  %195 = vmatpush.msra.mxu0 %v85
  %196 = vmatpush.msra.mxu0 %v84
  %197 = vmatmul.f32.gmra.mxu0 %v21
  %v198 = vpop.f32.mrf.mxu0
  %v199 = vadd.f32 %v134, %v198
  %200 = vmatmul.f32.gmra.mxu0 %v24
  %v201 = vpop.f32.mrf.mxu0
  %v202 = vadd.f32 %v137, %v201
  %203 = vmatmul.f32.gmra.mxu0 %v27
  %v204 = vpop.f32.mrf.mxu0
  %v205 = vadd.f32 %v140, %v204
  %206 = vmatmul.f32.gmra.mxu0 %v30
  %v207 = vpop.f32.mrf.mxu0
  %v208 = vadd.f32 %v143, %v207
  %209 = vmatmul.f32.gmra.mxu0 %v33
  %v210 = vpop.f32.mrf.mxu0
  %v211 = vadd.f32 %v146, %v210
  %212 = vmatmul.f32.gmra.mxu0 %v36
  %v213 = vpop.f32.mrf.mxu0
  %v214 = vadd.f32 %v149, %v213
  %215 = vmatmul.f32.gmra.mxu0 %v39
  %v216 = vpop.f32.mrf.mxu0
  %v217 = vadd.f32 %v152, %v216
  %218 = vmatmul.f32.gmra.mxu0 %v42
  %v219 = vpop.f32.mrf.mxu0
  %v220 = vadd.f32 %v155, %v219
  %221 = vmatmul.f32.gmra.mxu0 %v45
  %v222 = vpop.f32.mrf.mxu0
  %v223 = vadd.f32 %v158, %v222
  %224 = vmatmul.f32.gmra.mxu0 %v48
  %v225 = vpop.f32.mrf.mxu0
  %v226 = vadd.f32 %v161, %v225
  %227 = vmatmul.f32.gmra.mxu0 %v51
  %v228 = vpop.f32.mrf.mxu0
  %v229 = vadd.f32 %v164, %v228
  %230 = vmatmul.f32.gmra.mxu0 %v54
  %v231 = vpop.f32.mrf.mxu0
  %v232 = vadd.f32 %v167, %v231
  %233 = vmatmul.f32.gmra.mxu0 %v57
  %v234 = vpop.f32.mrf.mxu0
  %v235 = vadd.f32 %v170, %v234
  %236 = vmatmul.f32.gmra.mxu0 %v60
  %v237 = vpop.f32.mrf.mxu0
  %v238 = vadd.f32 %v173, %v237
  %239 = vmatmul.f32.gmra.mxu0 %v63
  %v240 = vpop.f32.mrf.mxu0
  %v241 = vadd.f32 %v176, %v240
  %242 = vmatmul.f32.gmra.mxu0 %v66
  %v243 = vpop.f32.mrf.mxu0
  %v244 = vadd.f32 %v179, %v243
  %245 = vdwg.mxu0
  %246 = vmatpush.msra.mxu0 %v115
  %247 = vmatpush.msra.mxu0 %v114
  %248 = vmatpush.msra.mxu0 %v113
  %249 = vmatpush.msra.mxu0 %v112
  %250 = vmatpush.msra.mxu0 %v111
  %251 = vmatpush.msra.mxu0 %v110
  %252 = vmatpush.msra.mxu0 %v109
  %253 = vmatpush.msra.mxu0 %v108
  %254 = vmatpush.msra.mxu0 %v107
  %255 = vmatpush.msra.mxu0 %v106
  %256 = vmatpush.msra.mxu0 %v105
  %257 = vmatpush.msra.mxu0 %v104
  %258 = vmatpush.msra.mxu0 %v103
  %259 = vmatpush.msra.mxu0 %v102
  %260 = vmatpush.msra.mxu0 %v101
  %261 = vmatpush.msra.mxu0 %v100
  %262 = vmatmul.f32.gmra.mxu0 %v22
  %v263 = vpop.f32.mrf.mxu0
  %v264 = vadd.f32 %v199, %v263
  %265 = vmatmul.f32.gmra.mxu0 %v25
  %v266 = vpop.f32.mrf.mxu0
  %v267 = vadd.f32 %v202, %v266
  %268 = vmatmul.f32.gmra.mxu0 %v28
  %v269 = vpop.f32.mrf.mxu0
  %v270 = vadd.f32 %v205, %v269
  %271 = vmatmul.f32.gmra.mxu0 %v31
  %v272 = vpop.f32.mrf.mxu0
  %v273 = vadd.f32 %v208, %v272
  %274 = vmatmul.f32.gmra.mxu0 %v34
  %v275 = vpop.f32.mrf.mxu0
  %v276 = vadd.f32 %v211, %v275
  %277 = vmatmul.f32.gmra.mxu0 %v37
  %v278 = vpop.f32.mrf.mxu0
  %v279 = vadd.f32 %v214, %v278
  %280 = vmatmul.f32.gmra.mxu0 %v40
  %v281 = vpop.f32.mrf.mxu0
  %v282 = vadd.f32 %v217, %v281
  %283 = vmatmul.f32.gmra.mxu0 %v43
  %v284 = vpop.f32.mrf.mxu0
  %v285 = vadd.f32 %v220, %v284
  %286 = vmatmul.f32.gmra.mxu0 %v46
  %v287 = vpop.f32.mrf.mxu0
  %v288 = vadd.f32 %v223, %v287
  %289 = vmatmul.f32.gmra.mxu0 %v49
  %v290 = vpop.f32.mrf.mxu0
  %v291 = vadd.f32 %v226, %v290
  %292 = vmatmul.f32.gmra.mxu0 %v52
  %v293 = vpop.f32.mrf.mxu0
  %v294 = vadd.f32 %v229, %v293
  %295 = vmatmul.f32.gmra.mxu0 %v55
  %v296 = vpop.f32.mrf.mxu0
  %v297 = vadd.f32 %v232, %v296
  %298 = vmatmul.f32.gmra.mxu0 %v58
  %v299 = vpop.f32.mrf.mxu0
  %v300 = vadd.f32 %v235, %v299
  %301 = vmatmul.f32.gmra.mxu0 %v61
  %v302 = vpop.f32.mrf.mxu0
  %v303 = vadd.f32 %v238, %v302
  %304 = vmatmul.f32.gmra.mxu0 %v64
  %v305 = vpop.f32.mrf.mxu0
  %v306 = vadd.f32 %v241, %v305
  %307 = vmatmul.f32.gmra.mxu0 %v67
  %v308 = vpop.f32.mrf.mxu0
  %v309 = vadd.f32 %v244, %v308
  %310 = vdwg.mxu0
  %v311 = vld [vmem:[%s2] sm:$0xff]
  %v312 = vld [vmem:[%s2 + $0x8] sm:$0xff]
  %v313 = vld [vmem:[%s2 + $0x10] sm:$0xff]
  %v314 = vld [vmem:[%s2 + $0x18] sm:$0xff]
  %v315 = vld [vmem:[%s2 + $0x20] sm:$0xff]
  %v316 = vld [vmem:[%s2 + $0x28] sm:$0xff]
  %v317 = vld [vmem:[%s2 + $0x30] sm:$0xff]
  %v318 = vld [vmem:[%s2 + $0x38] sm:$0xff]
  %v319 = vld [vmem:[%s2 + $0x40] sm:$0xff]
  %v320 = vld [vmem:[%s2 + $0x48] sm:$0xff]
  %v321 = vld [vmem:[%s2 + $0x50] sm:$0xff]
  %v322 = vld [vmem:[%s2 + $0x58] sm:$0xff]
  %v323 = vld [vmem:[%s2 + $0x60] sm:$0xff]
  %v324 = vld [vmem:[%s2 + $0x68] sm:$0xff]
  %v325 = vld [vmem:[%s2 + $0x70] sm:$0xff]
  %v326 = vld [vmem:[%s2 + $0x78] sm:$0xff]
  %327 = vmatpush.msra.mxu0 %v309
  %328 = vmatpush.msra.mxu0 %v306
  %329 = vmatpush.msra.mxu0 %v303
  %330 = vmatpush.msra.mxu0 %v300
  %331 = vmatpush.msra.mxu0 %v297
  %332 = vmatpush.msra.mxu0 %v294
  %333 = vmatpush.msra.mxu0 %v291
  %334 = vmatpush.msra.mxu0 %v288
  %335 = vmatpush.msra.mxu0 %v285
  %336 = vmatpush.msra.mxu0 %v282
  %337 = vmatpush.msra.mxu0 %v279
  %338 = vmatpush.msra.mxu0 %v276
  %339 = vmatpush.msra.mxu0 %v273
  %340 = vmatpush.msra.mxu0 %v270
  %341 = vmatpush.msra.mxu0 %v267
  %342 = vmatpush.msra.mxu0 %v264
  %343 = vmatmul.f32.gmra.mxu0 %v311
  %v344 = vpop.f32.mrf.mxu0
  %v345 = vadd.f32 0.0, %v344
  %346 = vmatmul.f32.gmra.mxu0 %v312
  %v347 = vpop.f32.mrf.mxu0
  %v348 = vadd.f32 0.0, %v347
  %349 = vmatmul.f32.gmra.mxu0 %v313
  %v350 = vpop.f32.mrf.mxu0
  %v351 = vadd.f32 0.0, %v350
  %352 = vmatmul.f32.gmra.mxu0 %v314
  %v353 = vpop.f32.mrf.mxu0
  %v354 = vadd.f32 0.0, %v353
  %355 = vmatmul.f32.gmra.mxu0 %v315
  %v356 = vpop.f32.mrf.mxu0
  %v357 = vadd.f32 0.0, %v356
  %358 = vmatmul.f32.gmra.mxu0 %v316
  %v359 = vpop.f32.mrf.mxu0
  %v360 = vadd.f32 0.0, %v359
  %361 = vmatmul.f32.gmra.mxu0 %v317
  %v362 = vpop.f32.mrf.mxu0
  %v363 = vadd.f32 0.0, %v362
  %364 = vmatmul.f32.gmra.mxu0 %v318
  %v365 = vpop.f32.mrf.mxu0
  %v366 = vadd.f32 0.0, %v365
  %367 = vmatmul.f32.gmra.mxu0 %v319
  %v368 = vpop.f32.mrf.mxu0
  %v369 = vadd.f32 0.0, %v368
  %370 = vmatmul.f32.gmra.mxu0 %v320
  %v371 = vpop.f32.mrf.mxu0
  %v372 = vadd.f32 0.0, %v371
  %373 = vmatmul.f32.gmra.mxu0 %v321
  %v374 = vpop.f32.mrf.mxu0
  %v375 = vadd.f32 0.0, %v374
  %376 = vmatmul.f32.gmra.mxu0 %v322
  %v377 = vpop.f32.mrf.mxu0
  %v378 = vadd.f32 0.0, %v377
  %379 = vmatmul.f32.gmra.mxu0 %v323
  %v380 = vpop.f32.mrf.mxu0
  %v381 = vadd.f32 0.0, %v380
  %382 = vmatmul.f32.gmra.mxu0 %v324
  %v383 = vpop.f32.mrf.mxu0
  %v384 = vadd.f32 0.0, %v383
  %385 = vmatmul.f32.gmra.mxu0 %v325
  %v386 = vpop.f32.mrf.mxu0
  %v387 = vadd.f32 0.0, %v386
  %388 = vmatmul.f32.gmra.mxu0 %v326
  %v389 = vpop.f32.mrf.mxu0
  %v390 = vadd.f32 0.0, %v389
  %391 = vdwg.mxu0
  %v392 = vld [vmem:[%s3] sm:$0xff]
  %v393 = vld [vmem:[%s3 + $0x8] sm:$0xff]
  %v394 = vld [vmem:[%s3 + $0x10] sm:$0xff]
  %v395 = vld [vmem:[%s3 + $0x18] sm:$0xff]
  %v396 = vld [vmem:[%s3 + $0x20] sm:$0xff]
  %v397 = vld [vmem:[%s3 + $0x28] sm:$0xff]
  %v398 = vld [vmem:[%s3 + $0x30] sm:$0xff]
  %v399 = vld [vmem:[%s3 + $0x38] sm:$0xff]
  %v400 = vld [vmem:[%s3 + $0x40] sm:$0xff]
  %v401 = vld [vmem:[%s3 + $0x48] sm:$0xff]
  %v402 = vld [vmem:[%s3 + $0x50] sm:$0xff]
  %v403 = vld [vmem:[%s3 + $0x58] sm:$0xff]
  %v404 = vld [vmem:[%s3 + $0x60] sm:$0xff]
  %v405 = vld [vmem:[%s3 + $0x68] sm:$0xff]
  %v406 = vld [vmem:[%s3 + $0x70] sm:$0xff]
  %v407 = vld [vmem:[%s3 + $0x78] sm:$0xff]
  %v408 = vld [vmem:[%s4] sm:$0x1]
  %v410 = vperm.slane %v408, 0
  %412 = vmatpush.msra.mxu0 %v407
  %413 = vmatpush.msra.mxu0 %v406
  %414 = vmatpush.msra.mxu0 %v405
  %415 = vmatpush.msra.mxu0 %v404
  %416 = vmatpush.msra.mxu0 %v403
  %417 = vmatpush.msra.mxu0 %v402
  %418 = vmatpush.msra.mxu0 %v401
  %419 = vmatpush.msra.mxu0 %v400
  %420 = vmatpush.msra.mxu0 %v399
  %421 = vmatpush.msra.mxu0 %v398
  %422 = vmatpush.msra.mxu0 %v397
  %423 = vmatpush.msra.mxu0 %v396
  %424 = vmatpush.msra.mxu0 %v395
  %425 = vmatpush.msra.mxu0 %v394
  %426 = vmatpush.msra.mxu0 %v393
  %427 = vmatpush.msra.mxu0 %v392
  %428 = vmatmul.f32.gmra.mxu0 %v345
  %v429 = vpop.f32.mrf.mxu0
  %v430 = vadd.f32 %v410, %v429
  %431 = vmatmul.f32.gmra.mxu0 %v348
  %v432 = vpop.f32.mrf.mxu0
  %v433 = vadd.f32 %v410, %v432
  %434 = vmatmul.f32.gmra.mxu0 %v351
  %v435 = vpop.f32.mrf.mxu0
  %v436 = vadd.f32 %v410, %v435
  %437 = vmatmul.f32.gmra.mxu0 %v354
  %v438 = vpop.f32.mrf.mxu0
  %v439 = vadd.f32 %v410, %v438
  %440 = vmatmul.f32.gmra.mxu0 %v357
  %v441 = vpop.f32.mrf.mxu0
  %v442 = vadd.f32 %v410, %v441
  %443 = vmatmul.f32.gmra.mxu0 %v360
  %v444 = vpop.f32.mrf.mxu0
  %v445 = vadd.f32 %v410, %v444
  %446 = vmatmul.f32.gmra.mxu0 %v363
  %v447 = vpop.f32.mrf.mxu0
  %v448 = vadd.f32 %v410, %v447
  %449 = vmatmul.f32.gmra.mxu0 %v366
  %v450 = vpop.f32.mrf.mxu0
  %v451 = vadd.f32 %v410, %v450
  %452 = vmatmul.f32.gmra.mxu0 %v369
  %v453 = vpop.f32.mrf.mxu0
  %v454 = vadd.f32 %v410, %v453
  %455 = vmatmul.f32.gmra.mxu0 %v372
  %v456 = vpop.f32.mrf.mxu0
  %v457 = vadd.f32 %v410, %v456
  %458 = vmatmul.f32.gmra.mxu0 %v375
  %v459 = vpop.f32.mrf.mxu0
  %v460 = vadd.f32 %v410, %v459
  %461 = vmatmul.f32.gmra.mxu0 %v378
  %v462 = vpop.f32.mrf.mxu0
  %v463 = vadd.f32 %v410, %v462
  %464 = vmatmul.f32.gmra.mxu0 %v381
  %v465 = vpop.f32.mrf.mxu0
  %v466 = vadd.f32 %v410, %v465
  %467 = vmatmul.f32.gmra.mxu0 %v384
  %v468 = vpop.f32.mrf.mxu0
  %v469 = vadd.f32 %v410, %v468
  %470 = vmatmul.f32.gmra.mxu0 %v387
  %v471 = vpop.f32.mrf.mxu0
  %v472 = vadd.f32 %v410, %v471
  %473 = vmatmul.f32.gmra.mxu0 %v390
  %v474 = vpop.f32.mrf.mxu0
  %v475 = vadd.f32 %v410, %v474
  %476 = vdwg.mxu0
  %v477 = vxor.u32 %v430, 2147483648
  %v478 = vxor.u32 %v433, 2147483648
  %v479 = vxor.u32 %v436, 2147483648
  %v480 = vxor.u32 %v439, 2147483648
  %v481 = vxor.u32 %v442, 2147483648
  %v482 = vxor.u32 %v445, 2147483648
  %v483 = vxor.u32 %v448, 2147483648
  %v484 = vxor.u32 %v451, 2147483648
  %v485 = vxor.u32 %v454, 2147483648
  %v486 = vxor.u32 %v457, 2147483648
  %v487 = vxor.u32 %v460, 2147483648
  %v488 = vxor.u32 %v463, 2147483648
  %v489 = vxor.u32 %v466, 2147483648
  %v490 = vxor.u32 %v469, 2147483648
  %v491 = vxor.u32 %v472, 2147483648
  %v492 = vxor.u32 %v475, 2147483648
  %v493 = vmul.f32 %v477, 1.442695
  %v494 = vpow.pop %v493
  %v495 = vmul.f32 %v478, 1.442695
  %v496 = vpow.pop %v495
  %v497 = vmul.f32 %v479, 1.442695
  %v498 = vpow.pop %v497
  %v499 = vmul.f32 %v480, 1.442695
  %v500 = vpow.pop %v499
  %v501 = vmul.f32 %v481, 1.442695
  %v502 = vpow.pop %v501
  %v503 = vmul.f32 %v482, 1.442695
  %v504 = vpow.pop %v503
  %v505 = vmul.f32 %v483, 1.442695
  %v506 = vpow.pop %v505
  %v507 = vmul.f32 %v484, 1.442695
  %v508 = vpow.pop %v507
  %v509 = vmul.f32 %v485, 1.442695
  %v510 = vpow.pop %v509
  %v511 = vmul.f32 %v486, 1.442695
  %v512 = vpow.pop %v511
  %v513 = vmul.f32 %v487, 1.442695
  %v514 = vpow.pop %v513
  %v515 = vmul.f32 %v488, 1.442695
  %v516 = vpow.pop %v515
  %v517 = vmul.f32 %v489, 1.442695
  %v518 = vpow.pop %v517
  %v519 = vmul.f32 %v490, 1.442695
  %v520 = vpow.pop %v519
  %v521 = vmul.f32 %v491, 1.442695
  %v522 = vpow.pop %v521
  %v523 = vmul.f32 %v492, 1.442695
  %v524 = vpow.pop %v523
  %v525 = vadd.f32 %v494, 1.0
  %v526 = vadd.f32 %v496, 1.0
  %v527 = vadd.f32 %v498, 1.0
  %v528 = vadd.f32 %v500, 1.0
  %v529 = vadd.f32 %v502, 1.0
  %v530 = vadd.f32 %v504, 1.0
  %v531 = vadd.f32 %v506, 1.0
  %v532 = vadd.f32 %v508, 1.0
  %v533 = vadd.f32 %v510, 1.0
  %v534 = vadd.f32 %v512, 1.0
  %v535 = vadd.f32 %v514, 1.0
  %v536 = vadd.f32 %v516, 1.0
  %v537 = vadd.f32 %v518, 1.0
  %v538 = vadd.f32 %v520, 1.0
  %v539 = vadd.f32 %v522, 1.0
  %v540 = vadd.f32 %v524, 1.0
  %v541 = vrcp.pop %v525
  %v542 = vmul.f32 %v525, %v541
  %v543 = vsub.f32 1.0, %v542
  %v544 = vmul.f32 %v541, %v543
  %v545 = vadd.f32 %v541, %v544
  %vm546 = vweird.f32 %v525
  %vm547 = vweird.f32 %v541
  %vm548 = vmor %vm546, %vm547
  %v549 = vsel %vm548, %v541, %v545
  %v550 = vand.u32 2147483647, %v525
  %vm551 = vcmp.eq.f32.partialorder %v550, 8.507059e+37
  %v552 = vand.u32 %v525, 2147483648
  %v553 = vor.u32 1.1754944e-38, %v552
  %v554 = vsel %vm551, %v553, %v549
  %v555 = vmul.f32 1.0, %v554
  %v556 = vrcp.pop %v526
  %v557 = vmul.f32 %v526, %v556
  %v558 = vsub.f32 1.0, %v557
  %v559 = vmul.f32 %v556, %v558
  %v560 = vadd.f32 %v556, %v559
  %vm561 = vweird.f32 %v526
  %vm562 = vweird.f32 %v556
  %vm563 = vmor %vm561, %vm562
  %v564 = vsel %vm563, %v556, %v560
  %v565 = vand.u32 2147483647, %v526
  %vm566 = vcmp.eq.f32.partialorder %v565, 8.507059e+37
  %v567 = vand.u32 %v526, 2147483648
  %v568 = vor.u32 1.1754944e-38, %v567
  %v569 = vsel %vm566, %v568, %v564
  %v570 = vmul.f32 1.0, %v569
  %v571 = vrcp.pop %v527
  %v572 = vmul.f32 %v527, %v571
  %v573 = vsub.f32 1.0, %v572
  %v574 = vmul.f32 %v571, %v573
  %v575 = vadd.f32 %v571, %v574
  %vm576 = vweird.f32 %v527
  %vm577 = vweird.f32 %v571
  %vm578 = vmor %vm576, %vm577
  %v579 = vsel %vm578, %v571, %v575
  %v580 = vand.u32 2147483647, %v527
  %vm581 = vcmp.eq.f32.partialorder %v580, 8.507059e+37
  %v582 = vand.u32 %v527, 2147483648
  %v583 = vor.u32 1.1754944e-38, %v582
  %v584 = vsel %vm581, %v583, %v579
  %v585 = vmul.f32 1.0, %v584
  %v586 = vrcp.pop %v528
  %v587 = vmul.f32 %v528, %v586
  %v588 = vsub.f32 1.0, %v587
  %v589 = vmul.f32 %v586, %v588
  %v590 = vadd.f32 %v586, %v589
  %vm591 = vweird.f32 %v528
  %vm592 = vweird.f32 %v586
  %vm593 = vmor %vm591, %vm592
  %v594 = vsel %vm593, %v586, %v590
  %v595 = vand.u32 2147483647, %v528
  %vm596 = vcmp.eq.f32.partialorder %v595, 8.507059e+37
  %v597 = vand.u32 %v528, 2147483648
  %v598 = vor.u32 1.1754944e-38, %v597
  %v599 = vsel %vm596, %v598, %v594
  %v600 = vmul.f32 1.0, %v599
  %v601 = vrcp.pop %v529
  %v602 = vmul.f32 %v529, %v601
  %v603 = vsub.f32 1.0, %v602
  %v604 = vmul.f32 %v601, %v603
  %v605 = vadd.f32 %v601, %v604
  %vm606 = vweird.f32 %v529
  %vm607 = vweird.f32 %v601
  %vm608 = vmor %vm606, %vm607
  %v609 = vsel %vm608, %v601, %v605
  %v610 = vand.u32 2147483647, %v529
  %vm611 = vcmp.eq.f32.partialorder %v610, 8.507059e+37
  %v612 = vand.u32 %v529, 2147483648
  %v613 = vor.u32 1.1754944e-38, %v612
  %v614 = vsel %vm611, %v613, %v609
  %v615 = vmul.f32 1.0, %v614
  %v616 = vrcp.pop %v530
  %v617 = vmul.f32 %v530, %v616
  %v618 = vsub.f32 1.0, %v617
  %v619 = vmul.f32 %v616, %v618
  %v620 = vadd.f32 %v616, %v619
  %vm621 = vweird.f32 %v530
  %vm622 = vweird.f32 %v616
  %vm623 = vmor %vm621, %vm622
  %v624 = vsel %vm623, %v616, %v620
  %v625 = vand.u32 2147483647, %v530
  %vm626 = vcmp.eq.f32.partialorder %v625, 8.507059e+37
  %v627 = vand.u32 %v530, 2147483648
  %v628 = vor.u32 1.1754944e-38, %v627
  %v629 = vsel %vm626, %v628, %v624
  %v630 = vmul.f32 1.0, %v629
  %v631 = vrcp.pop %v531
  %v632 = vmul.f32 %v531, %v631
  %v633 = vsub.f32 1.0, %v632
  %v634 = vmul.f32 %v631, %v633
  %v635 = vadd.f32 %v631, %v634
  %vm636 = vweird.f32 %v531
  %vm637 = vweird.f32 %v631
  %vm638 = vmor %vm636, %vm637
  %v639 = vsel %vm638, %v631, %v635
  %v640 = vand.u32 2147483647, %v531
  %vm641 = vcmp.eq.f32.partialorder %v640, 8.507059e+37
  %v642 = vand.u32 %v531, 2147483648
  %v643 = vor.u32 1.1754944e-38, %v642
  %v644 = vsel %vm641, %v643, %v639
  %v645 = vmul.f32 1.0, %v644
  %v646 = vrcp.pop %v532
  %v647 = vmul.f32 %v532, %v646
  %v648 = vsub.f32 1.0, %v647
  %v649 = vmul.f32 %v646, %v648
  %v650 = vadd.f32 %v646, %v649
  %vm651 = vweird.f32 %v532
  %vm652 = vweird.f32 %v646
  %vm653 = vmor %vm651, %vm652
  %v654 = vsel %vm653, %v646, %v650
  %v655 = vand.u32 2147483647, %v532
  %vm656 = vcmp.eq.f32.partialorder %v655, 8.507059e+37
  %v657 = vand.u32 %v532, 2147483648
  %v658 = vor.u32 1.1754944e-38, %v657
  %v659 = vsel %vm656, %v658, %v654
  %v660 = vmul.f32 1.0, %v659
  %v661 = vrcp.pop %v533
  %v662 = vmul.f32 %v533, %v661
  %v663 = vsub.f32 1.0, %v662
  %v664 = vmul.f32 %v661, %v663
  %v665 = vadd.f32 %v661, %v664
  %vm666 = vweird.f32 %v533
  %vm667 = vweird.f32 %v661
  %vm668 = vmor %vm666, %vm667
  %v669 = vsel %vm668, %v661, %v665
  %v670 = vand.u32 2147483647, %v533
  %vm671 = vcmp.eq.f32.partialorder %v670, 8.507059e+37
  %v672 = vand.u32 %v533, 2147483648
  %v673 = vor.u32 1.1754944e-38, %v672
  %v674 = vsel %vm671, %v673, %v669
  %v675 = vmul.f32 1.0, %v674
  %v676 = vrcp.pop %v534
  %v677 = vmul.f32 %v534, %v676
  %v678 = vsub.f32 1.0, %v677
  %v679 = vmul.f32 %v676, %v678
  %v680 = vadd.f32 %v676, %v679
  %vm681 = vweird.f32 %v534
  %vm682 = vweird.f32 %v676
  %vm683 = vmor %vm681, %vm682
  %v684 = vsel %vm683, %v676, %v680
  %v685 = vand.u32 2147483647, %v534
  %vm686 = vcmp.eq.f32.partialorder %v685, 8.507059e+37
  %v687 = vand.u32 %v534, 2147483648
  %v688 = vor.u32 1.1754944e-38, %v687
  %v689 = vsel %vm686, %v688, %v684
  %v690 = vmul.f32 1.0, %v689
  %v691 = vrcp.pop %v535
  %v692 = vmul.f32 %v535, %v691
  %v693 = vsub.f32 1.0, %v692
  %v694 = vmul.f32 %v691, %v693
  %v695 = vadd.f32 %v691, %v694
  %vm696 = vweird.f32 %v535
  %vm697 = vweird.f32 %v691
  %vm698 = vmor %vm696, %vm697
  %v699 = vsel %vm698, %v691, %v695
  %v700 = vand.u32 2147483647, %v535
  %vm701 = vcmp.eq.f32.partialorder %v700, 8.507059e+37
  %v702 = vand.u32 %v535, 2147483648
  %v703 = vor.u32 1.1754944e-38, %v702
  %v704 = vsel %vm701, %v703, %v699
  %v705 = vmul.f32 1.0, %v704
  %v706 = vrcp.pop %v536
  %v707 = vmul.f32 %v536, %v706
  %v708 = vsub.f32 1.0, %v707
  %v709 = vmul.f32 %v706, %v708
  %v710 = vadd.f32 %v706, %v709
  %vm711 = vweird.f32 %v536
  %vm712 = vweird.f32 %v706
  %vm713 = vmor %vm711, %vm712
  %v714 = vsel %vm713, %v706, %v710
  %v715 = vand.u32 2147483647, %v536
  %vm716 = vcmp.eq.f32.partialorder %v715, 8.507059e+37
  %v717 = vand.u32 %v536, 2147483648
  %v718 = vor.u32 1.1754944e-38, %v717
  %v719 = vsel %vm716, %v718, %v714
  %v720 = vmul.f32 1.0, %v719
  %v721 = vrcp.pop %v537
  %v722 = vmul.f32 %v537, %v721
  %v723 = vsub.f32 1.0, %v722
  %v724 = vmul.f32 %v721, %v723
  %v725 = vadd.f32 %v721, %v724
  %vm726 = vweird.f32 %v537
  %vm727 = vweird.f32 %v721
  %vm728 = vmor %vm726, %vm727
  %v729 = vsel %vm728, %v721, %v725
  %v730 = vand.u32 2147483647, %v537
  %vm731 = vcmp.eq.f32.partialorder %v730, 8.507059e+37
  %v732 = vand.u32 %v537, 2147483648
  %v733 = vor.u32 1.1754944e-38, %v732
  %v734 = vsel %vm731, %v733, %v729
  %v735 = vmul.f32 1.0, %v734
  %v736 = vrcp.pop %v538
  %v737 = vmul.f32 %v538, %v736
  %v738 = vsub.f32 1.0, %v737
  %v739 = vmul.f32 %v736, %v738
  %v740 = vadd.f32 %v736, %v739
  %vm741 = vweird.f32 %v538
  %vm742 = vweird.f32 %v736
  %vm743 = vmor %vm741, %vm742
  %v744 = vsel %vm743, %v736, %v740
  %v745 = vand.u32 2147483647, %v538
  %vm746 = vcmp.eq.f32.partialorder %v745, 8.507059e+37
  %v747 = vand.u32 %v538, 2147483648
  %v748 = vor.u32 1.1754944e-38, %v747
  %v749 = vsel %vm746, %v748, %v744
  %v750 = vmul.f32 1.0, %v749
  %v751 = vrcp.pop %v539
  %v752 = vmul.f32 %v539, %v751
  %v753 = vsub.f32 1.0, %v752
  %v754 = vmul.f32 %v751, %v753
  %v755 = vadd.f32 %v751, %v754
  %vm756 = vweird.f32 %v539
  %vm757 = vweird.f32 %v751
  %vm758 = vmor %vm756, %vm757
  %v759 = vsel %vm758, %v751, %v755
  %v760 = vand.u32 2147483647, %v539
  %vm761 = vcmp.eq.f32.partialorder %v760, 8.507059e+37
  %v762 = vand.u32 %v539, 2147483648
  %v763 = vor.u32 1.1754944e-38, %v762
  %v764 = vsel %vm761, %v763, %v759
  %v765 = vmul.f32 1.0, %v764
  %v766 = vrcp.pop %v540
  %v767 = vmul.f32 %v540, %v766
  %v768 = vsub.f32 1.0, %v767
  %v769 = vmul.f32 %v766, %v768
  %v770 = vadd.f32 %v766, %v769
  %vm771 = vweird.f32 %v540
  %vm772 = vweird.f32 %v766
  %vm773 = vmor %vm771, %vm772
  %v774 = vsel %vm773, %v766, %v770
  %v775 = vand.u32 2147483647, %v540
  %vm776 = vcmp.eq.f32.partialorder %v775, 8.507059e+37
  %v777 = vand.u32 %v540, 2147483648
  %v778 = vor.u32 1.1754944e-38, %v777
  %v779 = vsel %vm776, %v778, %v774
  %v780 = vmul.f32 1.0, %v779
  %781 = vmatpush.msra.mxu0 %v780
  %782 = vmatpush.msra.mxu0 %v765
  %783 = vmatpush.msra.mxu0 %v750
  %784 = vmatpush.msra.mxu0 %v735
  %785 = vmatpush.msra.mxu0 %v720
  %786 = vmatpush.msra.mxu0 %v705
  %787 = vmatpush.msra.mxu0 %v690
  %788 = vmatpush.msra.mxu0 %v675
  %789 = vmatpush.msra.mxu0 %v660
  %790 = vmatpush.msra.mxu0 %v645
  %791 = vmatpush.msra.mxu0 %v630
  %792 = vmatpush.msra.mxu0 %v615
  %793 = vmatpush.msra.mxu0 %v600
  %794 = vmatpush.msra.mxu0 %v585
  %795 = vmatpush.msra.mxu0 %v570
  %796 = vmatpush.msra.mxu0 %v555
  %797 = vmatmul.f32.gmra.mxu0 %v311
  %v798 = vpop.f32.mrf.mxu0
  %v799 = vadd.f32 0.0, %v798
  %800 = vmatmul.f32.gmra.mxu0 %v312
  %v801 = vpop.f32.mrf.mxu0
  %v802 = vadd.f32 0.0, %v801
  %803 = vmatmul.f32.gmra.mxu0 %v313
  %v804 = vpop.f32.mrf.mxu0
  %v805 = vadd.f32 0.0, %v804
  %806 = vmatmul.f32.gmra.mxu0 %v314
  %v807 = vpop.f32.mrf.mxu0
  %v808 = vadd.f32 0.0, %v807
  %809 = vmatmul.f32.gmra.mxu0 %v315
  %v810 = vpop.f32.mrf.mxu0
  %v811 = vadd.f32 0.0, %v810
  %812 = vmatmul.f32.gmra.mxu0 %v316
  %v813 = vpop.f32.mrf.mxu0
  %v814 = vadd.f32 0.0, %v813
  %815 = vmatmul.f32.gmra.mxu0 %v317
  %v816 = vpop.f32.mrf.mxu0
  %v817 = vadd.f32 0.0, %v816
  %818 = vmatmul.f32.gmra.mxu0 %v318
  %v819 = vpop.f32.mrf.mxu0
  %v820 = vadd.f32 0.0, %v819
  %821 = vmatmul.f32.gmra.mxu0 %v319
  %v822 = vpop.f32.mrf.mxu0
  %v823 = vadd.f32 0.0, %v822
  %824 = vmatmul.f32.gmra.mxu0 %v320
  %v825 = vpop.f32.mrf.mxu0
  %v826 = vadd.f32 0.0, %v825
  %827 = vmatmul.f32.gmra.mxu0 %v321
  %v828 = vpop.f32.mrf.mxu0
  %v829 = vadd.f32 0.0, %v828
  %830 = vmatmul.f32.gmra.mxu0 %v322
  %v831 = vpop.f32.mrf.mxu0
  %v832 = vadd.f32 0.0, %v831
  %833 = vmatmul.f32.gmra.mxu0 %v323
  %v834 = vpop.f32.mrf.mxu0
  %v835 = vadd.f32 0.0, %v834
  %836 = vmatmul.f32.gmra.mxu0 %v324
  %v837 = vpop.f32.mrf.mxu0
  %v838 = vadd.f32 0.0, %v837
  %839 = vmatmul.f32.gmra.mxu0 %v325
  %v840 = vpop.f32.mrf.mxu0
  %v841 = vadd.f32 0.0, %v840
  %842 = vmatmul.f32.gmra.mxu0 %v326
  %v843 = vpop.f32.mrf.mxu0
  %v844 = vadd.f32 0.0, %v843
  %845 = vdwg.mxu0
  %s846 = scalar_lea.vmem %s3, 128
  %v847 = vld [vmem:[%s846] sm:$0xff]
  %v848 = vld [vmem:[%s846 + $0x8] sm:$0xff]
  %v849 = vld [vmem:[%s846 + $0x10] sm:$0xff]
  %v850 = vld [vmem:[%s846 + $0x18] sm:$0xff]
  %v851 = vld [vmem:[%s846 + $0x20] sm:$0xff]
  %v852 = vld [vmem:[%s846 + $0x28] sm:$0xff]
  %v853 = vld [vmem:[%s846 + $0x30] sm:$0xff]
  %v854 = vld [vmem:[%s846 + $0x38] sm:$0xff]
  %v855 = vld [vmem:[%s846 + $0x40] sm:$0xff]
  %v856 = vld [vmem:[%s846 + $0x48] sm:$0xff]
  %v857 = vld [vmem:[%s846 + $0x50] sm:$0xff]
  %v858 = vld [vmem:[%s846 + $0x58] sm:$0xff]
  %v859 = vld [vmem:[%s846 + $0x60] sm:$0xff]
  %v860 = vld [vmem:[%s846 + $0x68] sm:$0xff]
  %v861 = vld [vmem:[%s846 + $0x70] sm:$0xff]
  %v862 = vld [vmem:[%s846 + $0x78] sm:$0xff]
  %s863 = scalar_lea.vmem %s4, 1
  %v864 = vld [vmem:[%s863] sm:$0x1]
  %v866 = vperm.slane %v864, 0
  %868 = vmatpush.msra.mxu0 %v862
  %869 = vmatpush.msra.mxu0 %v861
  %870 = vmatpush.msra.mxu0 %v860
  %871 = vmatpush.msra.mxu0 %v859
  %872 = vmatpush.msra.mxu0 %v858
  %873 = vmatpush.msra.mxu0 %v857
  %874 = vmatpush.msra.mxu0 %v856
  %875 = vmatpush.msra.mxu0 %v855
  %876 = vmatpush.msra.mxu0 %v854
  %877 = vmatpush.msra.mxu0 %v853
  %878 = vmatpush.msra.mxu0 %v852
  %879 = vmatpush.msra.mxu0 %v851
  %880 = vmatpush.msra.mxu0 %v850
  %881 = vmatpush.msra.mxu0 %v849
  %882 = vmatpush.msra.mxu0 %v848
  %883 = vmatpush.msra.mxu0 %v847
  %884 = vmatmul.f32.gmra.mxu0 %v799
  %v885 = vpop.f32.mrf.mxu0
  %v886 = vadd.f32 %v866, %v885
  %887 = vmatmul.f32.gmra.mxu0 %v802
  %v888 = vpop.f32.mrf.mxu0
  %v889 = vadd.f32 %v866, %v888
  %890 = vmatmul.f32.gmra.mxu0 %v805
  %v891 = vpop.f32.mrf.mxu0
  %v892 = vadd.f32 %v866, %v891
  %893 = vmatmul.f32.gmra.mxu0 %v808
  %v894 = vpop.f32.mrf.mxu0
  %v895 = vadd.f32 %v866, %v894
  %896 = vmatmul.f32.gmra.mxu0 %v811
  %v897 = vpop.f32.mrf.mxu0
  %v898 = vadd.f32 %v866, %v897
  %899 = vmatmul.f32.gmra.mxu0 %v814
  %v900 = vpop.f32.mrf.mxu0
  %v901 = vadd.f32 %v866, %v900
  %902 = vmatmul.f32.gmra.mxu0 %v817
  %v903 = vpop.f32.mrf.mxu0
  %v904 = vadd.f32 %v866, %v903
  %905 = vmatmul.f32.gmra.mxu0 %v820
  %v906 = vpop.f32.mrf.mxu0
  %v907 = vadd.f32 %v866, %v906
  %908 = vmatmul.f32.gmra.mxu0 %v823
  %v909 = vpop.f32.mrf.mxu0
  %v910 = vadd.f32 %v866, %v909
  %911 = vmatmul.f32.gmra.mxu0 %v826
  %v912 = vpop.f32.mrf.mxu0
  %v913 = vadd.f32 %v866, %v912
  %914 = vmatmul.f32.gmra.mxu0 %v829
  %v915 = vpop.f32.mrf.mxu0
  %v916 = vadd.f32 %v866, %v915
  %917 = vmatmul.f32.gmra.mxu0 %v832
  %v918 = vpop.f32.mrf.mxu0
  %v919 = vadd.f32 %v866, %v918
  %920 = vmatmul.f32.gmra.mxu0 %v835
  %v921 = vpop.f32.mrf.mxu0
  %v922 = vadd.f32 %v866, %v921
  %923 = vmatmul.f32.gmra.mxu0 %v838
  %v924 = vpop.f32.mrf.mxu0
  %v925 = vadd.f32 %v866, %v924
  %926 = vmatmul.f32.gmra.mxu0 %v841
  %v927 = vpop.f32.mrf.mxu0
  %v928 = vadd.f32 %v866, %v927
  %929 = vmatmul.f32.gmra.mxu0 %v844
  %v930 = vpop.f32.mrf.mxu0
  %v931 = vadd.f32 %v866, %v930
  %932 = vdwg.mxu0
  %v933 = vxor.u32 %v886, 2147483648
  %v934 = vxor.u32 %v889, 2147483648
  %v935 = vxor.u32 %v892, 2147483648
  %v936 = vxor.u32 %v895, 2147483648
  %v937 = vxor.u32 %v898, 2147483648
  %v938 = vxor.u32 %v901, 2147483648
  %v939 = vxor.u32 %v904, 2147483648
  %v940 = vxor.u32 %v907, 2147483648
  %v941 = vxor.u32 %v910, 2147483648
  %v942 = vxor.u32 %v913, 2147483648
  %v943 = vxor.u32 %v916, 2147483648
  %v944 = vxor.u32 %v919, 2147483648
  %v945 = vxor.u32 %v922, 2147483648
  %v946 = vxor.u32 %v925, 2147483648
  %v947 = vxor.u32 %v928, 2147483648
  %v948 = vxor.u32 %v931, 2147483648
  %v949 = vmul.f32 %v933, 1.442695
  %v950 = vpow.pop %v949
  %v951 = vmul.f32 %v934, 1.442695
  %v952 = vpow.pop %v951
  %v953 = vmul.f32 %v935, 1.442695
  %v954 = vpow.pop %v953
  %v955 = vmul.f32 %v936, 1.442695
  %v956 = vpow.pop %v955
  %v957 = vmul.f32 %v937, 1.442695
  %v958 = vpow.pop %v957
  %v959 = vmul.f32 %v938, 1.442695
  %v960 = vpow.pop %v959
  %v961 = vmul.f32 %v939, 1.442695
  %v962 = vpow.pop %v961
  %v963 = vmul.f32 %v940, 1.442695
  %v964 = vpow.pop %v963
  %v965 = vmul.f32 %v941, 1.442695
  %v966 = vpow.pop %v965
  %v967 = vmul.f32 %v942, 1.442695
  %v968 = vpow.pop %v967
  %v969 = vmul.f32 %v943, 1.442695
  %v970 = vpow.pop %v969
  %v971 = vmul.f32 %v944, 1.442695
  %v972 = vpow.pop %v971
  %v973 = vmul.f32 %v945, 1.442695
  %v974 = vpow.pop %v973
  %v975 = vmul.f32 %v946, 1.442695
  %v976 = vpow.pop %v975
  %v977 = vmul.f32 %v947, 1.442695
  %v978 = vpow.pop %v977
  %v979 = vmul.f32 %v948, 1.442695
  %v980 = vpow.pop %v979
  %v981 = vadd.f32 %v950, 1.0
  %v982 = vadd.f32 %v952, 1.0
  %v983 = vadd.f32 %v954, 1.0
  %v984 = vadd.f32 %v956, 1.0
  %v985 = vadd.f32 %v958, 1.0
  %v986 = vadd.f32 %v960, 1.0
  %v987 = vadd.f32 %v962, 1.0
  %v988 = vadd.f32 %v964, 1.0
  %v989 = vadd.f32 %v966, 1.0
  %v990 = vadd.f32 %v968, 1.0
  %v991 = vadd.f32 %v970, 1.0
  %v992 = vadd.f32 %v972, 1.0
  %v993 = vadd.f32 %v974, 1.0
  %v994 = vadd.f32 %v976, 1.0
  %v995 = vadd.f32 %v978, 1.0
  %v996 = vadd.f32 %v980, 1.0
  %v997 = vrcp.pop %v981
  %v998 = vmul.f32 %v981, %v997
  %v999 = vsub.f32 1.0, %v998
  %v1000 = vmul.f32 %v997, %v999
  %v1001 = vadd.f32 %v997, %v1000
  %vm1002 = vweird.f32 %v981
  %vm1003 = vweird.f32 %v997
  %vm1004 = vmor %vm1002, %vm1003
  %v1005 = vsel %vm1004, %v997, %v1001
  %v1006 = vand.u32 2147483647, %v981
  %vm1007 = vcmp.eq.f32.partialorder %v1006, 8.507059e+37
  %v1008 = vand.u32 %v981, 2147483648
  %v1009 = vor.u32 1.1754944e-38, %v1008
  %v1010 = vsel %vm1007, %v1009, %v1005
  %v1011 = vmul.f32 1.0, %v1010
  %v1012 = vrcp.pop %v982
  %v1013 = vmul.f32 %v982, %v1012
  %v1014 = vsub.f32 1.0, %v1013
  %v1015 = vmul.f32 %v1012, %v1014
  %v1016 = vadd.f32 %v1012, %v1015
  %vm1017 = vweird.f32 %v982
  %vm1018 = vweird.f32 %v1012
  %vm1019 = vmor %vm1017, %vm1018
  %v1020 = vsel %vm1019, %v1012, %v1016
  %v1021 = vand.u32 2147483647, %v982
  %vm1022 = vcmp.eq.f32.partialorder %v1021, 8.507059e+37
  %v1023 = vand.u32 %v982, 2147483648
  %v1024 = vor.u32 1.1754944e-38, %v1023
  %v1025 = vsel %vm1022, %v1024, %v1020
  %v1026 = vmul.f32 1.0, %v1025
  %v1027 = vrcp.pop %v983
  %v1028 = vmul.f32 %v983, %v1027
  %v1029 = vsub.f32 1.0, %v1028
  %v1030 = vmul.f32 %v1027, %v1029
  %v1031 = vadd.f32 %v1027, %v1030
  %vm1032 = vweird.f32 %v983
  %vm1033 = vweird.f32 %v1027
  %vm1034 = vmor %vm1032, %vm1033
  %v1035 = vsel %vm1034, %v1027, %v1031
  %v1036 = vand.u32 2147483647, %v983
  %vm1037 = vcmp.eq.f32.partialorder %v1036, 8.507059e+37
  %v1038 = vand.u32 %v983, 2147483648
  %v1039 = vor.u32 1.1754944e-38, %v1038
  %v1040 = vsel %vm1037, %v1039, %v1035
  %v1041 = vmul.f32 1.0, %v1040
  %v1042 = vrcp.pop %v984
  %v1043 = vmul.f32 %v984, %v1042
  %v1044 = vsub.f32 1.0, %v1043
  %v1045 = vmul.f32 %v1042, %v1044
  %v1046 = vadd.f32 %v1042, %v1045
  %vm1047 = vweird.f32 %v984
  %vm1048 = vweird.f32 %v1042
  %vm1049 = vmor %vm1047, %vm1048
  %v1050 = vsel %vm1049, %v1042, %v1046
  %v1051 = vand.u32 2147483647, %v984
  %vm1052 = vcmp.eq.f32.partialorder %v1051, 8.507059e+37
  %v1053 = vand.u32 %v984, 2147483648
  %v1054 = vor.u32 1.1754944e-38, %v1053
  %v1055 = vsel %vm1052, %v1054, %v1050
  %v1056 = vmul.f32 1.0, %v1055
  %v1057 = vrcp.pop %v985
  %v1058 = vmul.f32 %v985, %v1057
  %v1059 = vsub.f32 1.0, %v1058
  %v1060 = vmul.f32 %v1057, %v1059
  %v1061 = vadd.f32 %v1057, %v1060
  %vm1062 = vweird.f32 %v985
  %vm1063 = vweird.f32 %v1057
  %vm1064 = vmor %vm1062, %vm1063
  %v1065 = vsel %vm1064, %v1057, %v1061
  %v1066 = vand.u32 2147483647, %v985
  %vm1067 = vcmp.eq.f32.partialorder %v1066, 8.507059e+37
  %v1068 = vand.u32 %v985, 2147483648
  %v1069 = vor.u32 1.1754944e-38, %v1068
  %v1070 = vsel %vm1067, %v1069, %v1065
  %v1071 = vmul.f32 1.0, %v1070
  %v1072 = vrcp.pop %v986
  %v1073 = vmul.f32 %v986, %v1072
  %v1074 = vsub.f32 1.0, %v1073
  %v1075 = vmul.f32 %v1072, %v1074
  %v1076 = vadd.f32 %v1072, %v1075
  %vm1077 = vweird.f32 %v986
  %vm1078 = vweird.f32 %v1072
  %vm1079 = vmor %vm1077, %vm1078
  %v1080 = vsel %vm1079, %v1072, %v1076
  %v1081 = vand.u32 2147483647, %v986
  %vm1082 = vcmp.eq.f32.partialorder %v1081, 8.507059e+37
  %v1083 = vand.u32 %v986, 2147483648
  %v1084 = vor.u32 1.1754944e-38, %v1083
  %v1085 = vsel %vm1082, %v1084, %v1080
  %v1086 = vmul.f32 1.0, %v1085
  %v1087 = vrcp.pop %v987
  %v1088 = vmul.f32 %v987, %v1087
  %v1089 = vsub.f32 1.0, %v1088
  %v1090 = vmul.f32 %v1087, %v1089
  %v1091 = vadd.f32 %v1087, %v1090
  %vm1092 = vweird.f32 %v987
  %vm1093 = vweird.f32 %v1087
  %vm1094 = vmor %vm1092, %vm1093
  %v1095 = vsel %vm1094, %v1087, %v1091
  %v1096 = vand.u32 2147483647, %v987
  %vm1097 = vcmp.eq.f32.partialorder %v1096, 8.507059e+37
  %v1098 = vand.u32 %v987, 2147483648
  %v1099 = vor.u32 1.1754944e-38, %v1098
  %v1100 = vsel %vm1097, %v1099, %v1095
  %v1101 = vmul.f32 1.0, %v1100
  %v1102 = vrcp.pop %v988
  %v1103 = vmul.f32 %v988, %v1102
  %v1104 = vsub.f32 1.0, %v1103
  %v1105 = vmul.f32 %v1102, %v1104
  %v1106 = vadd.f32 %v1102, %v1105
  %vm1107 = vweird.f32 %v988
  %vm1108 = vweird.f32 %v1102
  %vm1109 = vmor %vm1107, %vm1108
  %v1110 = vsel %vm1109, %v1102, %v1106
  %v1111 = vand.u32 2147483647, %v988
  %vm1112 = vcmp.eq.f32.partialorder %v1111, 8.507059e+37
  %v1113 = vand.u32 %v988, 2147483648
  %v1114 = vor.u32 1.1754944e-38, %v1113
  %v1115 = vsel %vm1112, %v1114, %v1110
  %v1116 = vmul.f32 1.0, %v1115
  %v1117 = vrcp.pop %v989
  %v1118 = vmul.f32 %v989, %v1117
  %v1119 = vsub.f32 1.0, %v1118
  %v1120 = vmul.f32 %v1117, %v1119
  %v1121 = vadd.f32 %v1117, %v1120
  %vm1122 = vweird.f32 %v989
  %vm1123 = vweird.f32 %v1117
  %vm1124 = vmor %vm1122, %vm1123
  %v1125 = vsel %vm1124, %v1117, %v1121
  %v1126 = vand.u32 2147483647, %v989
  %vm1127 = vcmp.eq.f32.partialorder %v1126, 8.507059e+37
  %v1128 = vand.u32 %v989, 2147483648
  %v1129 = vor.u32 1.1754944e-38, %v1128
  %v1130 = vsel %vm1127, %v1129, %v1125
  %v1131 = vmul.f32 1.0, %v1130
  %v1132 = vrcp.pop %v990
  %v1133 = vmul.f32 %v990, %v1132
  %v1134 = vsub.f32 1.0, %v1133
  %v1135 = vmul.f32 %v1132, %v1134
  %v1136 = vadd.f32 %v1132, %v1135
  %vm1137 = vweird.f32 %v990
  %vm1138 = vweird.f32 %v1132
  %vm1139 = vmor %vm1137, %vm1138
  %v1140 = vsel %vm1139, %v1132, %v1136
  %v1141 = vand.u32 2147483647, %v990
  %vm1142 = vcmp.eq.f32.partialorder %v1141, 8.507059e+37
  %v1143 = vand.u32 %v990, 2147483648
  %v1144 = vor.u32 1.1754944e-38, %v1143
  %v1145 = vsel %vm1142, %v1144, %v1140
  %v1146 = vmul.f32 1.0, %v1145
  %v1147 = vrcp.pop %v991
  %v1148 = vmul.f32 %v991, %v1147
  %v1149 = vsub.f32 1.0, %v1148
  %v1150 = vmul.f32 %v1147, %v1149
  %v1151 = vadd.f32 %v1147, %v1150
  %vm1152 = vweird.f32 %v991
  %vm1153 = vweird.f32 %v1147
  %vm1154 = vmor %vm1152, %vm1153
  %v1155 = vsel %vm1154, %v1147, %v1151
  %v1156 = vand.u32 2147483647, %v991
  %vm1157 = vcmp.eq.f32.partialorder %v1156, 8.507059e+37
  %v1158 = vand.u32 %v991, 2147483648
  %v1159 = vor.u32 1.1754944e-38, %v1158
  %v1160 = vsel %vm1157, %v1159, %v1155
  %v1161 = vmul.f32 1.0, %v1160
  %v1162 = vrcp.pop %v992
  %v1163 = vmul.f32 %v992, %v1162
  %v1164 = vsub.f32 1.0, %v1163
  %v1165 = vmul.f32 %v1162, %v1164
  %v1166 = vadd.f32 %v1162, %v1165
  %vm1167 = vweird.f32 %v992
  %vm1168 = vweird.f32 %v1162
  %vm1169 = vmor %vm1167, %vm1168
  %v1170 = vsel %vm1169, %v1162, %v1166
  %v1171 = vand.u32 2147483647, %v992
  %vm1172 = vcmp.eq.f32.partialorder %v1171, 8.507059e+37
  %v1173 = vand.u32 %v992, 2147483648
  %v1174 = vor.u32 1.1754944e-38, %v1173
  %v1175 = vsel %vm1172, %v1174, %v1170
  %v1176 = vmul.f32 1.0, %v1175
  %v1177 = vrcp.pop %v993
  %v1178 = vmul.f32 %v993, %v1177
  %v1179 = vsub.f32 1.0, %v1178
  %v1180 = vmul.f32 %v1177, %v1179
  %v1181 = vadd.f32 %v1177, %v1180
  %vm1182 = vweird.f32 %v993
  %vm1183 = vweird.f32 %v1177
  %vm1184 = vmor %vm1182, %vm1183
  %v1185 = vsel %vm1184, %v1177, %v1181
  %v1186 = vand.u32 2147483647, %v993
  %vm1187 = vcmp.eq.f32.partialorder %v1186, 8.507059e+37
  %v1188 = vand.u32 %v993, 2147483648
  %v1189 = vor.u32 1.1754944e-38, %v1188
  %v1190 = vsel %vm1187, %v1189, %v1185
  %v1191 = vmul.f32 1.0, %v1190
  %v1192 = vrcp.pop %v994
  %v1193 = vmul.f32 %v994, %v1192
  %v1194 = vsub.f32 1.0, %v1193
  %v1195 = vmul.f32 %v1192, %v1194
  %v1196 = vadd.f32 %v1192, %v1195
  %vm1197 = vweird.f32 %v994
  %vm1198 = vweird.f32 %v1192
  %vm1199 = vmor %vm1197, %vm1198
  %v1200 = vsel %vm1199, %v1192, %v1196
  %v1201 = vand.u32 2147483647, %v994
  %vm1202 = vcmp.eq.f32.partialorder %v1201, 8.507059e+37
  %v1203 = vand.u32 %v994, 2147483648
  %v1204 = vor.u32 1.1754944e-38, %v1203
  %v1205 = vsel %vm1202, %v1204, %v1200
  %v1206 = vmul.f32 1.0, %v1205
  %v1207 = vrcp.pop %v995
  %v1208 = vmul.f32 %v995, %v1207
  %v1209 = vsub.f32 1.0, %v1208
  %v1210 = vmul.f32 %v1207, %v1209
  %v1211 = vadd.f32 %v1207, %v1210
  %vm1212 = vweird.f32 %v995
  %vm1213 = vweird.f32 %v1207
  %vm1214 = vmor %vm1212, %vm1213
  %v1215 = vsel %vm1214, %v1207, %v1211
  %v1216 = vand.u32 2147483647, %v995
  %vm1217 = vcmp.eq.f32.partialorder %v1216, 8.507059e+37
  %v1218 = vand.u32 %v995, 2147483648
  %v1219 = vor.u32 1.1754944e-38, %v1218
  %v1220 = vsel %vm1217, %v1219, %v1215
  %v1221 = vmul.f32 1.0, %v1220
  %v1222 = vrcp.pop %v996
  %v1223 = vmul.f32 %v996, %v1222
  %v1224 = vsub.f32 1.0, %v1223
  %v1225 = vmul.f32 %v1222, %v1224
  %v1226 = vadd.f32 %v1222, %v1225
  %vm1227 = vweird.f32 %v996
  %vm1228 = vweird.f32 %v1222
  %vm1229 = vmor %vm1227, %vm1228
  %v1230 = vsel %vm1229, %v1222, %v1226
  %v1231 = vand.u32 2147483647, %v996
  %vm1232 = vcmp.eq.f32.partialorder %v1231, 8.507059e+37
  %v1233 = vand.u32 %v996, 2147483648
  %v1234 = vor.u32 1.1754944e-38, %v1233
  %v1235 = vsel %vm1232, %v1234, %v1230
  %v1236 = vmul.f32 1.0, %v1235
  %1237 = vmatpush.msra.mxu0 %v1236
  %1238 = vmatpush.msra.mxu0 %v1221
  %1239 = vmatpush.msra.mxu0 %v1206
  %1240 = vmatpush.msra.mxu0 %v1191
  %1241 = vmatpush.msra.mxu0 %v1176
  %1242 = vmatpush.msra.mxu0 %v1161
  %1243 = vmatpush.msra.mxu0 %v1146
  %1244 = vmatpush.msra.mxu0 %v1131
  %1245 = vmatpush.msra.mxu0 %v1116
  %1246 = vmatpush.msra.mxu0 %v1101
  %1247 = vmatpush.msra.mxu0 %v1086
  %1248 = vmatpush.msra.mxu0 %v1071
  %1249 = vmatpush.msra.mxu0 %v1056
  %1250 = vmatpush.msra.mxu0 %v1041
  %1251 = vmatpush.msra.mxu0 %v1026
  %1252 = vmatpush.msra.mxu0 %v1011
  %1253 = vmatmul.f32.gmra.mxu0 %v311
  %v1254 = vpop.f32.mrf.mxu0
  %v1255 = vadd.f32 0.0, %v1254
  %1256 = vmatmul.f32.gmra.mxu0 %v312
  %v1257 = vpop.f32.mrf.mxu0
  %v1258 = vadd.f32 0.0, %v1257
  %1259 = vmatmul.f32.gmra.mxu0 %v313
  %v1260 = vpop.f32.mrf.mxu0
  %v1261 = vadd.f32 0.0, %v1260
  %1262 = vmatmul.f32.gmra.mxu0 %v314
  %v1263 = vpop.f32.mrf.mxu0
  %v1264 = vadd.f32 0.0, %v1263
  %1265 = vmatmul.f32.gmra.mxu0 %v315
  %v1266 = vpop.f32.mrf.mxu0
  %v1267 = vadd.f32 0.0, %v1266
  %1268 = vmatmul.f32.gmra.mxu0 %v316
  %v1269 = vpop.f32.mrf.mxu0
  %v1270 = vadd.f32 0.0, %v1269
  %1271 = vmatmul.f32.gmra.mxu0 %v317
  %v1272 = vpop.f32.mrf.mxu0
  %v1273 = vadd.f32 0.0, %v1272
  %1274 = vmatmul.f32.gmra.mxu0 %v318
  %v1275 = vpop.f32.mrf.mxu0
  %v1276 = vadd.f32 0.0, %v1275
  %1277 = vmatmul.f32.gmra.mxu0 %v319
  %v1278 = vpop.f32.mrf.mxu0
  %v1279 = vadd.f32 0.0, %v1278
  %1280 = vmatmul.f32.gmra.mxu0 %v320
  %v1281 = vpop.f32.mrf.mxu0
  %v1282 = vadd.f32 0.0, %v1281
  %1283 = vmatmul.f32.gmra.mxu0 %v321
  %v1284 = vpop.f32.mrf.mxu0
  %v1285 = vadd.f32 0.0, %v1284
  %1286 = vmatmul.f32.gmra.mxu0 %v322
  %v1287 = vpop.f32.mrf.mxu0
  %v1288 = vadd.f32 0.0, %v1287
  %1289 = vmatmul.f32.gmra.mxu0 %v323
  %v1290 = vpop.f32.mrf.mxu0
  %v1291 = vadd.f32 0.0, %v1290
  %1292 = vmatmul.f32.gmra.mxu0 %v324
  %v1293 = vpop.f32.mrf.mxu0
  %v1294 = vadd.f32 0.0, %v1293
  %1295 = vmatmul.f32.gmra.mxu0 %v325
  %v1296 = vpop.f32.mrf.mxu0
  %v1297 = vadd.f32 0.0, %v1296
  %1298 = vmatmul.f32.gmra.mxu0 %v326
  %v1299 = vpop.f32.mrf.mxu0
  %v1300 = vadd.f32 0.0, %v1299
  %1301 = vdwg.mxu0
  %s1302 = scalar_lea.vmem %s3, 256
  %v1303 = vld [vmem:[%s1302] sm:$0xff]
  %v1304 = vld [vmem:[%s1302 + $0x8] sm:$0xff]
  %v1305 = vld [vmem:[%s1302 + $0x10] sm:$0xff]
  %v1306 = vld [vmem:[%s1302 + $0x18] sm:$0xff]
  %v1307 = vld [vmem:[%s1302 + $0x20] sm:$0xff]
  %v1308 = vld [vmem:[%s1302 + $0x28] sm:$0xff]
  %v1309 = vld [vmem:[%s1302 + $0x30] sm:$0xff]
  %v1310 = vld [vmem:[%s1302 + $0x38] sm:$0xff]
  %v1311 = vld [vmem:[%s1302 + $0x40] sm:$0xff]
  %v1312 = vld [vmem:[%s1302 + $0x48] sm:$0xff]
  %v1313 = vld [vmem:[%s1302 + $0x50] sm:$0xff]
  %v1314 = vld [vmem:[%s1302 + $0x58] sm:$0xff]
  %v1315 = vld [vmem:[%s1302 + $0x60] sm:$0xff]
  %v1316 = vld [vmem:[%s1302 + $0x68] sm:$0xff]
  %v1317 = vld [vmem:[%s1302 + $0x70] sm:$0xff]
  %v1318 = vld [vmem:[%s1302 + $0x78] sm:$0xff]
  %s1319 = scalar_lea.vmem %s4, 2
  %v1320 = vld [vmem:[%s1319] sm:$0x1]
  %v1322 = vperm.slane %v1320, 0
  %1324 = vmatpush.msra.mxu0 %v1318
  %1325 = vmatpush.msra.mxu0 %v1317
  %1326 = vmatpush.msra.mxu0 %v1316
  %1327 = vmatpush.msra.mxu0 %v1315
  %1328 = vmatpush.msra.mxu0 %v1314
  %1329 = vmatpush.msra.mxu0 %v1313
  %1330 = vmatpush.msra.mxu0 %v1312
  %1331 = vmatpush.msra.mxu0 %v1311
  %1332 = vmatpush.msra.mxu0 %v1310
  %1333 = vmatpush.msra.mxu0 %v1309
  %1334 = vmatpush.msra.mxu0 %v1308
  %1335 = vmatpush.msra.mxu0 %v1307
  %1336 = vmatpush.msra.mxu0 %v1306
  %1337 = vmatpush.msra.mxu0 %v1305
  %1338 = vmatpush.msra.mxu0 %v1304
  %1339 = vmatpush.msra.mxu0 %v1303
  %1340 = vmatmul.f32.gmra.mxu0 %v1255
  %v1341 = vpop.f32.mrf.mxu0
  %v1342 = vadd.f32 %v1322, %v1341
  %1343 = vmatmul.f32.gmra.mxu0 %v1258
  %v1344 = vpop.f32.mrf.mxu0
  %v1345 = vadd.f32 %v1322, %v1344
  %1346 = vmatmul.f32.gmra.mxu0 %v1261
  %v1347 = vpop.f32.mrf.mxu0
  %v1348 = vadd.f32 %v1322, %v1347
  %1349 = vmatmul.f32.gmra.mxu0 %v1264
  %v1350 = vpop.f32.mrf.mxu0
  %v1351 = vadd.f32 %v1322, %v1350
  %1352 = vmatmul.f32.gmra.mxu0 %v1267
  %v1353 = vpop.f32.mrf.mxu0
  %v1354 = vadd.f32 %v1322, %v1353
  %1355 = vmatmul.f32.gmra.mxu0 %v1270
  %v1356 = vpop.f32.mrf.mxu0
  %v1357 = vadd.f32 %v1322, %v1356
  %1358 = vmatmul.f32.gmra.mxu0 %v1273
  %v1359 = vpop.f32.mrf.mxu0
  %v1360 = vadd.f32 %v1322, %v1359
  %1361 = vmatmul.f32.gmra.mxu0 %v1276
  %v1362 = vpop.f32.mrf.mxu0
  %v1363 = vadd.f32 %v1322, %v1362
  %1364 = vmatmul.f32.gmra.mxu0 %v1279
  %v1365 = vpop.f32.mrf.mxu0
  %v1366 = vadd.f32 %v1322, %v1365
  %1367 = vmatmul.f32.gmra.mxu0 %v1282
  %v1368 = vpop.f32.mrf.mxu0
  %v1369 = vadd.f32 %v1322, %v1368
  %1370 = vmatmul.f32.gmra.mxu0 %v1285
  %v1371 = vpop.f32.mrf.mxu0
  %v1372 = vadd.f32 %v1322, %v1371
  %1373 = vmatmul.f32.gmra.mxu0 %v1288
  %v1374 = vpop.f32.mrf.mxu0
  %v1375 = vadd.f32 %v1322, %v1374
  %1376 = vmatmul.f32.gmra.mxu0 %v1291
  %v1377 = vpop.f32.mrf.mxu0
  %v1378 = vadd.f32 %v1322, %v1377
  %1379 = vmatmul.f32.gmra.mxu0 %v1294
  %v1380 = vpop.f32.mrf.mxu0
  %v1381 = vadd.f32 %v1322, %v1380
  %1382 = vmatmul.f32.gmra.mxu0 %v1297
  %v1383 = vpop.f32.mrf.mxu0
  %v1384 = vadd.f32 %v1322, %v1383
  %1385 = vmatmul.f32.gmra.mxu0 %v1300
  %v1386 = vpop.f32.mrf.mxu0
  %v1387 = vadd.f32 %v1322, %v1386
  %1388 = vdwg.mxu0
  %v1389 = vxor.u32 %v1342, 2147483648
  %v1390 = vxor.u32 %v1345, 2147483648
  %v1391 = vxor.u32 %v1348, 2147483648
  %v1392 = vxor.u32 %v1351, 2147483648
  %v1393 = vxor.u32 %v1354, 2147483648
  %v1394 = vxor.u32 %v1357, 2147483648
  %v1395 = vxor.u32 %v1360, 2147483648
  %v1396 = vxor.u32 %v1363, 2147483648
  %v1397 = vxor.u32 %v1366, 2147483648
  %v1398 = vxor.u32 %v1369, 2147483648
  %v1399 = vxor.u32 %v1372, 2147483648
  %v1400 = vxor.u32 %v1375, 2147483648
  %v1401 = vxor.u32 %v1378, 2147483648
  %v1402 = vxor.u32 %v1381, 2147483648
  %v1403 = vxor.u32 %v1384, 2147483648
  %v1404 = vxor.u32 %v1387, 2147483648
  %v1405 = vmul.f32 %v1389, 1.442695
  %v1406 = vpow.pop %v1405
  %v1407 = vmul.f32 %v1390, 1.442695
  %v1408 = vpow.pop %v1407
  %v1409 = vmul.f32 %v1391, 1.442695
  %v1410 = vpow.pop %v1409
  %v1411 = vmul.f32 %v1392, 1.442695
  %v1412 = vpow.pop %v1411
  %v1413 = vmul.f32 %v1393, 1.442695
  %v1414 = vpow.pop %v1413
  %v1415 = vmul.f32 %v1394, 1.442695
  %v1416 = vpow.pop %v1415
  %v1417 = vmul.f32 %v1395, 1.442695
  %v1418 = vpow.pop %v1417
  %v1419 = vmul.f32 %v1396, 1.442695
  %v1420 = vpow.pop %v1419
  %v1421 = vmul.f32 %v1397, 1.442695
  %v1422 = vpow.pop %v1421
  %v1423 = vmul.f32 %v1398, 1.442695
  %v1424 = vpow.pop %v1423
  %v1425 = vmul.f32 %v1399, 1.442695
  %v1426 = vpow.pop %v1425
  %v1427 = vmul.f32 %v1400, 1.442695
  %v1428 = vpow.pop %v1427
  %v1429 = vmul.f32 %v1401, 1.442695
  %v1430 = vpow.pop %v1429
  %v1431 = vmul.f32 %v1402, 1.442695
  %v1432 = vpow.pop %v1431
  %v1433 = vmul.f32 %v1403, 1.442695
  %v1434 = vpow.pop %v1433
  %v1435 = vmul.f32 %v1404, 1.442695
  %v1436 = vpow.pop %v1435
  %v1437 = vadd.f32 %v1406, 1.0
  %v1438 = vadd.f32 %v1408, 1.0
  %v1439 = vadd.f32 %v1410, 1.0
  %v1440 = vadd.f32 %v1412, 1.0
  %v1441 = vadd.f32 %v1414, 1.0
  %v1442 = vadd.f32 %v1416, 1.0
  %v1443 = vadd.f32 %v1418, 1.0
  %v1444 = vadd.f32 %v1420, 1.0
  %v1445 = vadd.f32 %v1422, 1.0
  %v1446 = vadd.f32 %v1424, 1.0
  %v1447 = vadd.f32 %v1426, 1.0
  %v1448 = vadd.f32 %v1428, 1.0
  %v1449 = vadd.f32 %v1430, 1.0
  %v1450 = vadd.f32 %v1432, 1.0
  %v1451 = vadd.f32 %v1434, 1.0
  %v1452 = vadd.f32 %v1436, 1.0
  %v1453 = vrcp.pop %v1437
  %v1454 = vmul.f32 %v1437, %v1453
  %v1455 = vsub.f32 1.0, %v1454
  %v1456 = vmul.f32 %v1453, %v1455
  %v1457 = vadd.f32 %v1453, %v1456
  %vm1458 = vweird.f32 %v1437
  %vm1459 = vweird.f32 %v1453
  %vm1460 = vmor %vm1458, %vm1459
  %v1461 = vsel %vm1460, %v1453, %v1457
  %v1462 = vand.u32 2147483647, %v1437
  %vm1463 = vcmp.eq.f32.partialorder %v1462, 8.507059e+37
  %v1464 = vand.u32 %v1437, 2147483648
  %v1465 = vor.u32 1.1754944e-38, %v1464
  %v1466 = vsel %vm1463, %v1465, %v1461
  %v1467 = vmul.f32 1.0, %v1466
  %v1468 = vrcp.pop %v1438
  %v1469 = vmul.f32 %v1438, %v1468
  %v1470 = vsub.f32 1.0, %v1469
  %v1471 = vmul.f32 %v1468, %v1470
  %v1472 = vadd.f32 %v1468, %v1471
  %vm1473 = vweird.f32 %v1438
  %vm1474 = vweird.f32 %v1468
  %vm1475 = vmor %vm1473, %vm1474
  %v1476 = vsel %vm1475, %v1468, %v1472
  %v1477 = vand.u32 2147483647, %v1438
  %vm1478 = vcmp.eq.f32.partialorder %v1477, 8.507059e+37
  %v1479 = vand.u32 %v1438, 2147483648
  %v1480 = vor.u32 1.1754944e-38, %v1479
  %v1481 = vsel %vm1478, %v1480, %v1476
  %v1482 = vmul.f32 1.0, %v1481
  %v1483 = vrcp.pop %v1439
  %v1484 = vmul.f32 %v1439, %v1483
  %v1485 = vsub.f32 1.0, %v1484
  %v1486 = vmul.f32 %v1483, %v1485
  %v1487 = vadd.f32 %v1483, %v1486
  %vm1488 = vweird.f32 %v1439
  %vm1489 = vweird.f32 %v1483
  %vm1490 = vmor %vm1488, %vm1489
  %v1491 = vsel %vm1490, %v1483, %v1487
  %v1492 = vand.u32 2147483647, %v1439
  %vm1493 = vcmp.eq.f32.partialorder %v1492, 8.507059e+37
  %v1494 = vand.u32 %v1439, 2147483648
  %v1495 = vor.u32 1.1754944e-38, %v1494
  %v1496 = vsel %vm1493, %v1495, %v1491
  %v1497 = vmul.f32 1.0, %v1496
  %v1498 = vrcp.pop %v1440
  %v1499 = vmul.f32 %v1440, %v1498
  %v1500 = vsub.f32 1.0, %v1499
  %v1501 = vmul.f32 %v1498, %v1500
  %v1502 = vadd.f32 %v1498, %v1501
  %vm1503 = vweird.f32 %v1440
  %vm1504 = vweird.f32 %v1498
  %vm1505 = vmor %vm1503, %vm1504
  %v1506 = vsel %vm1505, %v1498, %v1502
  %v1507 = vand.u32 2147483647, %v1440
  %vm1508 = vcmp.eq.f32.partialorder %v1507, 8.507059e+37
  %v1509 = vand.u32 %v1440, 2147483648
  %v1510 = vor.u32 1.1754944e-38, %v1509
  %v1511 = vsel %vm1508, %v1510, %v1506
  %v1512 = vmul.f32 1.0, %v1511
  %v1513 = vrcp.pop %v1441
  %v1514 = vmul.f32 %v1441, %v1513
  %v1515 = vsub.f32 1.0, %v1514
  %v1516 = vmul.f32 %v1513, %v1515
  %v1517 = vadd.f32 %v1513, %v1516
  %vm1518 = vweird.f32 %v1441
  %vm1519 = vweird.f32 %v1513
  %vm1520 = vmor %vm1518, %vm1519
  %v1521 = vsel %vm1520, %v1513, %v1517
  %v1522 = vand.u32 2147483647, %v1441
  %vm1523 = vcmp.eq.f32.partialorder %v1522, 8.507059e+37
  %v1524 = vand.u32 %v1441, 2147483648
  %v1525 = vor.u32 1.1754944e-38, %v1524
  %v1526 = vsel %vm1523, %v1525, %v1521
  %v1527 = vmul.f32 1.0, %v1526
  %v1528 = vrcp.pop %v1442
  %v1529 = vmul.f32 %v1442, %v1528
  %v1530 = vsub.f32 1.0, %v1529
  %v1531 = vmul.f32 %v1528, %v1530
  %v1532 = vadd.f32 %v1528, %v1531
  %vm1533 = vweird.f32 %v1442
  %vm1534 = vweird.f32 %v1528
  %vm1535 = vmor %vm1533, %vm1534
  %v1536 = vsel %vm1535, %v1528, %v1532
  %v1537 = vand.u32 2147483647, %v1442
  %vm1538 = vcmp.eq.f32.partialorder %v1537, 8.507059e+37
  %v1539 = vand.u32 %v1442, 2147483648
  %v1540 = vor.u32 1.1754944e-38, %v1539
  %v1541 = vsel %vm1538, %v1540, %v1536
  %v1542 = vmul.f32 1.0, %v1541
  %v1543 = vrcp.pop %v1443
  %v1544 = vmul.f32 %v1443, %v1543
  %v1545 = vsub.f32 1.0, %v1544
  %v1546 = vmul.f32 %v1543, %v1545
  %v1547 = vadd.f32 %v1543, %v1546
  %vm1548 = vweird.f32 %v1443
  %vm1549 = vweird.f32 %v1543
  %vm1550 = vmor %vm1548, %vm1549
  %v1551 = vsel %vm1550, %v1543, %v1547
  %v1552 = vand.u32 2147483647, %v1443
  %vm1553 = vcmp.eq.f32.partialorder %v1552, 8.507059e+37
  %v1554 = vand.u32 %v1443, 2147483648
  %v1555 = vor.u32 1.1754944e-38, %v1554
  %v1556 = vsel %vm1553, %v1555, %v1551
  %v1557 = vmul.f32 1.0, %v1556
  %v1558 = vrcp.pop %v1444
  %v1559 = vmul.f32 %v1444, %v1558
  %v1560 = vsub.f32 1.0, %v1559
  %v1561 = vmul.f32 %v1558, %v1560
  %v1562 = vadd.f32 %v1558, %v1561
  %vm1563 = vweird.f32 %v1444
  %vm1564 = vweird.f32 %v1558
  %vm1565 = vmor %vm1563, %vm1564
  %v1566 = vsel %vm1565, %v1558, %v1562
  %v1567 = vand.u32 2147483647, %v1444
  %vm1568 = vcmp.eq.f32.partialorder %v1567, 8.507059e+37
  %v1569 = vand.u32 %v1444, 2147483648
  %v1570 = vor.u32 1.1754944e-38, %v1569
  %v1571 = vsel %vm1568, %v1570, %v1566
  %v1572 = vmul.f32 1.0, %v1571
  %v1573 = vrcp.pop %v1445
  %v1574 = vmul.f32 %v1445, %v1573
  %v1575 = vsub.f32 1.0, %v1574
  %v1576 = vmul.f32 %v1573, %v1575
  %v1577 = vadd.f32 %v1573, %v1576
  %vm1578 = vweird.f32 %v1445
  %vm1579 = vweird.f32 %v1573
  %vm1580 = vmor %vm1578, %vm1579
  %v1581 = vsel %vm1580, %v1573, %v1577
  %v1582 = vand.u32 2147483647, %v1445
  %vm1583 = vcmp.eq.f32.partialorder %v1582, 8.507059e+37
  %v1584 = vand.u32 %v1445, 2147483648
  %v1585 = vor.u32 1.1754944e-38, %v1584
  %v1586 = vsel %vm1583, %v1585, %v1581
  %v1587 = vmul.f32 1.0, %v1586
  %v1588 = vrcp.pop %v1446
  %v1589 = vmul.f32 %v1446, %v1588
  %v1590 = vsub.f32 1.0, %v1589
  %v1591 = vmul.f32 %v1588, %v1590
  %v1592 = vadd.f32 %v1588, %v1591
  %vm1593 = vweird.f32 %v1446
  %vm1594 = vweird.f32 %v1588
  %vm1595 = vmor %vm1593, %vm1594
  %v1596 = vsel %vm1595, %v1588, %v1592
  %v1597 = vand.u32 2147483647, %v1446
  %vm1598 = vcmp.eq.f32.partialorder %v1597, 8.507059e+37
  %v1599 = vand.u32 %v1446, 2147483648
  %v1600 = vor.u32 1.1754944e-38, %v1599
  %v1601 = vsel %vm1598, %v1600, %v1596
  %v1602 = vmul.f32 1.0, %v1601
  %v1603 = vrcp.pop %v1447
  %v1604 = vmul.f32 %v1447, %v1603
  %v1605 = vsub.f32 1.0, %v1604
  %v1606 = vmul.f32 %v1603, %v1605
  %v1607 = vadd.f32 %v1603, %v1606
  %vm1608 = vweird.f32 %v1447
  %vm1609 = vweird.f32 %v1603
  %vm1610 = vmor %vm1608, %vm1609
  %v1611 = vsel %vm1610, %v1603, %v1607
  %v1612 = vand.u32 2147483647, %v1447
  %vm1613 = vcmp.eq.f32.partialorder %v1612, 8.507059e+37
  %v1614 = vand.u32 %v1447, 2147483648
  %v1615 = vor.u32 1.1754944e-38, %v1614
  %v1616 = vsel %vm1613, %v1615, %v1611
  %v1617 = vmul.f32 1.0, %v1616
  %v1618 = vrcp.pop %v1448
  %v1619 = vmul.f32 %v1448, %v1618
  %v1620 = vsub.f32 1.0, %v1619
  %v1621 = vmul.f32 %v1618, %v1620
  %v1622 = vadd.f32 %v1618, %v1621
  %vm1623 = vweird.f32 %v1448
  %vm1624 = vweird.f32 %v1618
  %vm1625 = vmor %vm1623, %vm1624
  %v1626 = vsel %vm1625, %v1618, %v1622
  %v1627 = vand.u32 2147483647, %v1448
  %vm1628 = vcmp.eq.f32.partialorder %v1627, 8.507059e+37
  %v1629 = vand.u32 %v1448, 2147483648
  %v1630 = vor.u32 1.1754944e-38, %v1629
  %v1631 = vsel %vm1628, %v1630, %v1626
  %v1632 = vmul.f32 1.0, %v1631
  %v1633 = vrcp.pop %v1449
  %v1634 = vmul.f32 %v1449, %v1633
  %v1635 = vsub.f32 1.0, %v1634
  %v1636 = vmul.f32 %v1633, %v1635
  %v1637 = vadd.f32 %v1633, %v1636
  %vm1638 = vweird.f32 %v1449
  %vm1639 = vweird.f32 %v1633
  %vm1640 = vmor %vm1638, %vm1639
  %v1641 = vsel %vm1640, %v1633, %v1637
  %v1642 = vand.u32 2147483647, %v1449
  %vm1643 = vcmp.eq.f32.partialorder %v1642, 8.507059e+37
  %v1644 = vand.u32 %v1449, 2147483648
  %v1645 = vor.u32 1.1754944e-38, %v1644
  %v1646 = vsel %vm1643, %v1645, %v1641
  %v1647 = vmul.f32 1.0, %v1646
  %v1648 = vrcp.pop %v1450
  %v1649 = vmul.f32 %v1450, %v1648
  %v1650 = vsub.f32 1.0, %v1649
  %v1651 = vmul.f32 %v1648, %v1650
  %v1652 = vadd.f32 %v1648, %v1651
  %vm1653 = vweird.f32 %v1450
  %vm1654 = vweird.f32 %v1648
  %vm1655 = vmor %vm1653, %vm1654
  %v1656 = vsel %vm1655, %v1648, %v1652
  %v1657 = vand.u32 2147483647, %v1450
  %vm1658 = vcmp.eq.f32.partialorder %v1657, 8.507059e+37
  %v1659 = vand.u32 %v1450, 2147483648
  %v1660 = vor.u32 1.1754944e-38, %v1659
  %v1661 = vsel %vm1658, %v1660, %v1656
  %v1662 = vmul.f32 1.0, %v1661
  %v1663 = vrcp.pop %v1451
  %v1664 = vmul.f32 %v1451, %v1663
  %v1665 = vsub.f32 1.0, %v1664
  %v1666 = vmul.f32 %v1663, %v1665
  %v1667 = vadd.f32 %v1663, %v1666
  %vm1668 = vweird.f32 %v1451
  %vm1669 = vweird.f32 %v1663
  %vm1670 = vmor %vm1668, %vm1669
  %v1671 = vsel %vm1670, %v1663, %v1667
  %v1672 = vand.u32 2147483647, %v1451
  %vm1673 = vcmp.eq.f32.partialorder %v1672, 8.507059e+37
  %v1674 = vand.u32 %v1451, 2147483648
  %v1675 = vor.u32 1.1754944e-38, %v1674
  %v1676 = vsel %vm1673, %v1675, %v1671
  %v1677 = vmul.f32 1.0, %v1676
  %v1678 = vrcp.pop %v1452
  %v1679 = vmul.f32 %v1452, %v1678
  %v1680 = vsub.f32 1.0, %v1679
  %v1681 = vmul.f32 %v1678, %v1680
  %v1682 = vadd.f32 %v1678, %v1681
  %vm1683 = vweird.f32 %v1452
  %vm1684 = vweird.f32 %v1678
  %vm1685 = vmor %vm1683, %vm1684
  %v1686 = vsel %vm1685, %v1678, %v1682
  %v1687 = vand.u32 2147483647, %v1452
  %vm1688 = vcmp.eq.f32.partialorder %v1687, 8.507059e+37
  %v1689 = vand.u32 %v1452, 2147483648
  %v1690 = vor.u32 1.1754944e-38, %v1689
  %v1691 = vsel %vm1688, %v1690, %v1686
  %v1692 = vmul.f32 1.0, %v1691
  %1693 = vst [vmem:[%s5] sm:$0xff] %v1467
  %1694 = vst [vmem:[%s5 + $0x8] sm:$0xff] %v1482
  %1695 = vst [vmem:[%s5 + $0x10] sm:$0xff] %v1497
  %1696 = vst [vmem:[%s5 + $0x18] sm:$0xff] %v1512
  %1697 = vst [vmem:[%s5 + $0x20] sm:$0xff] %v1527
  %1698 = vst [vmem:[%s5 + $0x28] sm:$0xff] %v1542
  %1699 = vst [vmem:[%s5 + $0x30] sm:$0xff] %v1557
  %1700 = vst [vmem:[%s5 + $0x38] sm:$0xff] %v1572
  %1701 = vst [vmem:[%s5 + $0x40] sm:$0xff] %v1587
  %1702 = vst [vmem:[%s5 + $0x48] sm:$0xff] %v1602
  %1703 = vst [vmem:[%s5 + $0x50] sm:$0xff] %v1617
  %1704 = vst [vmem:[%s5 + $0x58] sm:$0xff] %v1632
  %1705 = vst [vmem:[%s5 + $0x60] sm:$0xff] %v1647
  %1706 = vst [vmem:[%s5 + $0x68] sm:$0xff] %v1662
  %1707 = vst [vmem:[%s5 + $0x70] sm:$0xff] %v1677
  %1708 = vst [vmem:[%s5 + $0x78] sm:$0xff] %v1692
  // Predicated region
  $region22: #{mygat_forward.1} parent=0 // pred_check
    _
  $region23: #{mygat_forward.1} parent=0 // pred_check_branch
    %1710 = sbr.rel (0) target = $region25
  $region24: #{mygat_forward.1} parent=0 // pred_region
    _
  $region25: #{mygat_forward.1} parent=0 // pred_fallthru
    _
  // Predicated region
  $region26: #{mygat_forward.1} parent=0 // pred_check
    _
  $region27: #{mygat_forward.1} parent=0 // pred_check_branch
    %1712 = sbr.rel (0) target = $region29
  $region28: #{mygat_forward.1} parent=0 // pred_region
    _
  $region29: #{mygat_forward.1} parent=0 // pred_fallthru
    _

</llo_original>
